<compile_context>
chip_gen: v7x
topology: tpu7x:2x2x1
jax: 0.10.0
libtpu: 0.0.40
codegen_flags: <defaults>
</compile_context>

<pallas_src>
import jax
import jax.numpy as jnp
from jax.experimental import pallas as pl
from jax.experimental.pallas import tpu as pltpu


# -----------------------------------------------------------------------------
# Fused 2-layer MLP kernel, natural (token-major) layout, no transposes:
#   h = GELU(x[:,0:1]*W1[0,:] + x[:,1:2]*W1[1,:] + b1)   (K=2 -> two VPU FMAs)
#   y = h_bf16 @ W2_bf16 + b2                            (K=H -> MXU, f32 acc)
# Shapes: x (M, 2) f32, w1 (2, H) f32, b1 (1, H) f32, w2 (H, D) bf16,
#         b2 (1, D) f32, out (M, D) f32.
# -----------------------------------------------------------------------------
def _mlp_kernel(x_ref, w1_ref, b1_ref, w2_ref, b2_ref, o_ref):
    x = x_ref[...]                                    # (M, 2) f32
    w1 = w1_ref[...]                                  # (2, H) f32

    # K=2 contraction as an explicit rank-2 outer-product sum on the VPU
    # (avoids pushing a 2-deep contraction through the MXU).
    h = (x[:, 0:1] * w1[0:1, :]                       # (M,1)*(1,H) -> (M,H)
         + x[:, 1:2] * w1[1:2, :]
         + b1_ref[...])                               # + (1,H) sublane broadcast

    # TODO(synk): PyTorch nn.GELU defaults to the exact erf form; the tanh
    # approximation is used here (max deviation ~1e-3) because it lowers
    # cleanly to the EUP on all TPU generations.
    h = jax.nn.gelu(h, approximate=True)              # (M, H)  EUP

    # Second layer on the MXU with bf16 operands, f32 accumulate.
    y = jnp.dot(h.astype(jnp.bfloat16), w2_ref[...],
                preferred_element_type=jnp.float32)   # (M, D)
    o_ref[...] = (y + b2_ref[...]).astype(o_ref.dtype)


def interpolation_mlp(x, w1, b1, w2_bf16, b2):
    """x: (M, 2) f32 -> (M, D) f32; one straight-line VMEM-resident kernel."""
    M, K = x.shape
    H = w1.shape[1]
    D = w2_bf16.shape[1]

    # Whole-array, unblocked VMEM operands: no grid, no pipelining machinery.
    vmem = pl.BlockSpec(memory_space=pltpu.MemorySpace.VMEM)

    flops = 2 * K * H * M + H * M + 2 * D * H * M + D * M
    bytes_accessed = (4 * (x.size + w1.size + b1.size + b2.size + M * D)
                      + 2 * w2_bf16.size)
    cost = pl.CostEstimate(flops=flops,
                           transcendentals=H * M,
                           bytes_accessed=bytes_accessed)

    return pl.pallas_call(
        _mlp_kernel,
        out_shape=jax.ShapeDtypeStruct((M, D), jnp.float32),
        in_specs=[vmem, vmem, vmem, vmem, vmem],
        out_specs=vmem,
        cost_estimate=cost,
    )(x, w1, b1, w2_bf16, b2)


# -----------------------------------------------------------------------------
# ModelWrapper equivalent
# -----------------------------------------------------------------------------
class ModelWrapperPallas:
    """JAX/Pallas analogue of ModelWrapper(torch.nn.Module).

    Holds the parameters of model.vision_model.embeddings.mlp and reproduces:
        mlp_out = mlp(grid.flatten(0, 1)).reshape(24, 24, -1).flatten(0, 1)
    W2 is pre-cast to bf16 once at construction for the MXU-native second layer.
    """

    def __init__(self, mlp_params):
        w1, b1, w2, b2 = mlp_params          # w1 (K,H), b1 (1,H), w2 (H,D), b2 (1,D)
        self.w1 = jnp.asarray(w1, jnp.float32)                    # (K, H)
        self.b1 = jnp.asarray(b1, jnp.float32).reshape(1, -1)     # (1, H)
        self.w2 = jnp.asarray(w2, jnp.bfloat16)                   # (H, D) bf16 for MXU
        self.b2 = jnp.asarray(b2, jnp.float32).reshape(1, -1)     # (1, D)

    def __call__(self, inputs, grid):
        # TODO(synk): `out = self.model(**inputs)` invokes an arbitrary, unspecified
        # backbone (a full vision-language model); it cannot be reproduced here, so
        # the inputs are passed through unchanged as `out`.
        out = inputs

        # grid.flatten(0, 1): (24, 24, 2) -> (576, 2). Row-major merge of leading
        # dims is a free bitcast reshape — no transpose, no extra XLA kernel.
        x = grid.reshape(-1, grid.shape[-1]).astype(jnp.float32)      # (M, K)
        mlp_out = interpolation_mlp(x, self.w1, self.b1, self.w2, self.b2)  # (M, D)
        # .reshape(24, 24, -1).flatten(0, 1) is the identity on (576, D);
        # kept for semantic fidelity (free bitcast reshapes).
        mlp_out = mlp_out.reshape(24, 24, -1).reshape(24 * 24, -1)
        return out, mlp_out


# -----------------------------------------------------------------------------
# Pure-JAX f32 reference for a correctness check
# -----------------------------------------------------------------------------
def _mlp_ref(x, w1, b1, w2, b2):
    # Same functional form as the kernel (tanh GELU) but all-f32 math; the
    # kernel's bf16 second layer introduces ~1e-3-level deviation (tolerated
    # below). See TODO in the kernel regarding erf vs tanh GELU.
    h = jax.nn.gelu(x @ w1 + b1.reshape(1, -1), approximate=True)
    return h @ w2 + b2.reshape(1, -1)


if __name__ == "__main__":
    key = jax.random.PRNGKey(0)
    k_in, k_grid, k_w1, k_b1, k_w2, k_b2 = jax.random.split(key, 6)

    # Small, shape-consistent synthetic setup:
    #   grid of 24x24 normalized 2-D coordinates (the module hard-codes 24x24),
    #   MLP: 2 -> hidden(32) -> embed(64).
    IN_DIM, HIDDEN, EMBED = 2, 32, 64

    # Deterministic grid of coordinates in [0, 1) plus a bit of jitter.
    ys, xs = jnp.meshgrid(jnp.arange(24), jnp.arange(24), indexing="ij")
    grid = jnp.stack([ys, xs], axis=-1).astype(jnp.float32) / 24.0      # (24, 24, 2)
    grid = grid + 0.01 * jax.random.normal(k_grid, grid.shape, jnp.float32)

    # Backbone inputs (passed through; see TODO above). NCHW as in PyTorch.
    inputs = {"pixel_values": jax.random.normal(k_in, (2, 4, 16, 16), jnp.float32)}

    # Deterministic MLP parameters (row-major, PyTorch x @ W convention).
    w1 = 0.1 * jax.random.normal(k_w1, (IN_DIM, HIDDEN), jnp.float32)
    b1 = 0.1 * jax.random.normal(k_b1, (1, HIDDEN), jnp.float32)
    w2 = 0.1 * jax.random.normal(k_w2, (HIDDEN, EMBED), jnp.float32)
    b2 = 0.1 * jax.random.normal(k_b2, (1, EMBED), jnp.float32)

    wrapper = ModelWrapperPallas((w1, b1, w2, b2))
    out, mlp_out = wrapper(inputs, grid)
    mlp_out = jax.block_until_ready(mlp_out)

    # Sanity-check against the pure-JAX f32 reference (tolerance covers the
    # intentional bf16 MXU operands in the second layer).
    ref = _mlp_ref(grid.reshape(-1, IN_DIM), w1, b1, w2, b2)
    assert mlp_out.shape == (576, EMBED), mlp_out.shape
    assert jnp.allclose(mlp_out, ref, atol=1e-2, rtol=1e-2), (
        float(jnp.max(jnp.abs(mlp_out - ref))))

    print("KERNEL_OK")
</pallas_src>

<mosaic_0001>
module attributes {stable_mosaic.version = 11 : i64} {
  func.func @_mlp_kernel(%arg0: memref<576x2xf32, #tpu.memory_space<vmem>>, %arg1: memref<2x32xf32, #tpu.memory_space<vmem>>, %arg2: memref<1x32xf32, #tpu.memory_space<vmem>>, %arg3: memref<32x64xbf16, #tpu.memory_space<vmem>>, %arg4: memref<1x64xf32, #tpu.memory_space<vmem>>, %arg5: memref<576x64xf32, #tpu.memory_space<vmem>>) attributes {dimension_semantics = [], scalar_prefetch = 0 : i64, scratch_operands = 0 : i64, tpu.core_type = #tpu.core_type<tc>} {
    %c0 = arith.constant 0 : index
    %c0_0 = arith.constant 0 : index
    %0 = vector.load %arg0[%c0, %c0_0] : memref<576x2xf32, #tpu.memory_space<vmem>>, vector<576x2xf32>
    %c0_1 = arith.constant 0 : index
    %c0_2 = arith.constant 0 : index
    %1 = vector.load %arg1[%c0_1, %c0_2] : memref<2x32xf32, #tpu.memory_space<vmem>>, vector<2x32xf32>
    %2 = vector.extract_strided_slice %0 {offsets = [0, 0], sizes = [576, 1], strides = [1, 1]} : vector<576x2xf32> to vector<576x1xf32>
    %3 = vector.extract_strided_slice %1 {offsets = [0, 0], sizes = [1, 32], strides = [1, 1]} : vector<2x32xf32> to vector<1x32xf32>
    %4 = vector.broadcast %2 : vector<576x1xf32> to vector<576x32xf32>
    %5 = vector.broadcast %3 : vector<1x32xf32> to vector<576x32xf32>
    %6 = arith.mulf %4, %5 : vector<576x32xf32>
    %7 = vector.extract_strided_slice %0 {offsets = [0, 1], sizes = [576, 1], strides = [1, 1]} : vector<576x2xf32> to vector<576x1xf32>
    %8 = vector.extract_strided_slice %1 {offsets = [1, 0], sizes = [1, 32], strides = [1, 1]} : vector<2x32xf32> to vector<1x32xf32>
    %9 = vector.broadcast %7 : vector<576x1xf32> to vector<576x32xf32>
    %10 = vector.broadcast %8 : vector<1x32xf32> to vector<576x32xf32>
    %11 = arith.mulf %9, %10 : vector<576x32xf32>
    %12 = arith.addf %6, %11 : vector<576x32xf32>
    %c0_3 = arith.constant 0 : index
    %c0_4 = arith.constant 0 : index
    %13 = vector.load %arg2[%c0_3, %c0_4] : memref<1x32xf32, #tpu.memory_space<vmem>>, vector<1x32xf32>
    %14 = vector.broadcast %13 : vector<1x32xf32> to vector<576x32xf32>
    %15 = arith.addf %12, %14 : vector<576x32xf32>
    %16 = arith.mulf %15, %15 : vector<576x32xf32>
    %17 = arith.mulf %15, %16 : vector<576x32xf32>
    %cst = arith.constant 4.471500e-02 : f32
    %18 = vector.broadcast %cst : f32 to vector<576x32xf32>
    %19 = arith.mulf %18, %17 : vector<576x32xf32>
    %20 = arith.addf %15, %19 : vector<576x32xf32>
    %cst_5 = arith.constant 0.797884583 : f32
    %21 = vector.broadcast %cst_5 : f32 to vector<576x32xf32>
    %22 = arith.mulf %21, %20 : vector<576x32xf32>
    %23 = math.tanh %22 : vector<576x32xf32>
    %cst_6 = arith.constant 1.000000e+00 : f32
    %24 = vector.broadcast %cst_6 : f32 to vector<576x32xf32>
    %25 = arith.addf %24, %23 : vector<576x32xf32>
    %cst_7 = arith.constant 5.000000e-01 : f32
    %26 = vector.broadcast %cst_7 : f32 to vector<576x32xf32>
    %27 = arith.mulf %26, %25 : vector<576x32xf32>
    %28 = arith.mulf %15, %27 : vector<576x32xf32>
    %29 = arith.truncf %28 : vector<576x32xf32> to vector<576x32xbf16>
    %c0_8 = arith.constant 0 : index
    %c0_9 = arith.constant 0 : index
    %30 = vector.load %arg3[%c0_8, %c0_9] : memref<32x64xbf16, #tpu.memory_space<vmem>>, vector<32x64xbf16>
    %cst_10 = arith.constant dense<0.000000e+00> : vector<576x64xf32>
    %31 = tpu.matmul %29, %30, %cst_10 {dimension_numbers = #tpu.dot_dimension_numbers<[1], [0], [0], [1], [0, 0, 1, 1], [], []>} : vector<576x32xbf16>, vector<32x64xbf16>, vector<576x64xf32> -> vector<576x64xf32>
    %c0_11 = arith.constant 0 : index
    %c0_12 = arith.constant 0 : index
    %32 = vector.load %arg4[%c0_11, %c0_12] : memref<1x64xf32, #tpu.memory_space<vmem>>, vector<1x64xf32>
    %33 = vector.broadcast %32 : vector<1x64xf32> to vector<576x64xf32>
    %34 = arith.addf %31, %33 : vector<576x64xf32>
    %c0_13 = arith.constant 0 : index
    %c0_14 = arith.constant 0 : index
    %35 = vector.load %arg5[%c0_13, %c0_14] : memref<576x64xf32, #tpu.memory_space<vmem>>, vector<576x64xf32>
    tpu.vector_store %arg5[%c0_13, %c0_14], %34 {strides = array<i32>} : memref<576x64xf32, #tpu.memory_space<vmem>>, vector<576x64xf32>,
    return
  }
}

</mosaic_0001>

<llo_original>
// kernel: tpu_custom_call.1
$region0: #{tpu_custom_call.1}
  #allocation0 [shape = 'u32[]', space=smem, size = 0x4, offset = 0x4, fixed_abs, tag = 'smem constant byte address 0x4 - core index']
  #allocation1 [shape = 'u32[144,128]{1,0:T(1,128)}', space=vmem, size = 0x12000, scoped, tag = 'internal scratch']
  %s0 = inlined_call_operand.vmem [shape: f32[576,2], index: 0, kind: input, shape index: {}]
  %s1 = inlined_call_operand.vmem [shape: f32[2,32], index: 1, kind: input, shape index: {}]
  %s2 = inlined_call_operand.vmem [shape: f32[1,32], index: 2, kind: input, shape index: {}]
  %s3 = inlined_call_operand.vmem [shape: bf16[32,64], index: 3, kind: input, shape index: {}]
  %s4 = inlined_call_operand.vmem [shape: f32[1,64], index: 4, kind: input, shape index: {}]
  %s5 = inlined_call_operand.vmem [shape: f32[576,64], index: 5, kind: output, shape index: {}]
  %s6 = sld [smem:[#allocation0]]
  $region30: #{tpu_custom_call.1} parent=0
    _
  %s8 = ssub.s32 1, %s6
  %s9 = scalar_select 0, %s8, %s6
  // Predicated region
  $region2: #{tpu_custom_call.1} parent=0 // pred_check
    _
  $region3: #{tpu_custom_call.1} parent=0 // pred_check_branch
    %11 = sbr.rel (0) target = $region5
  $region4: #{tpu_custom_call.1} parent=0 // pred_region
    _
  $region5: #{tpu_custom_call.1} parent=0 // pred_fallthru
    _
  // Predicated region
  $region6: #{tpu_custom_call.1} parent=0 // pred_check
    _
  $region7: #{tpu_custom_call.1} parent=0 // pred_check_branch
    %13 = sbr.rel (0) target = $region9
  $region8: #{tpu_custom_call.1} parent=0 // pred_region
    _
  $region9: #{tpu_custom_call.1} parent=0 // pred_fallthru
    _
  // Predicated region
  $region10: #{tpu_custom_call.1} parent=0 // pred_check
    _
  $region11: #{tpu_custom_call.1} parent=0 // pred_check_branch
    %15 = sbr.rel (0) target = $region13
  $region12: #{tpu_custom_call.1} parent=0 // pred_region
    _
  $region13: #{tpu_custom_call.1} parent=0 // pred_fallthru
    _
  // Predicated region
  $region14: #{tpu_custom_call.1} parent=0 // pred_check
    _
  $region15: #{tpu_custom_call.1} parent=0 // pred_check_branch
    %17 = sbr.rel (0) target = $region17
  $region16: #{tpu_custom_call.1} parent=0 // pred_region
    _
  $region17: #{tpu_custom_call.1} parent=0 // pred_fallthru
    _
  // Predicated region
  $region18: #{tpu_custom_call.1} parent=0 // pred_check
    _
  $region19: #{tpu_custom_call.1} parent=0 // pred_check_branch
    %19 = sbr.rel (0) target = $region21
  $region20: #{tpu_custom_call.1} parent=0 // pred_region
    _
  $region21: #{tpu_custom_call.1} parent=0 // pred_fallthru
    _
  %v21 = vld [vmem:[%s0] sm:$0xff]
  %v22 = vld [vmem:[%s0 + $0x8] sm:$0xff]
  %v23 = vld [vmem:[%s0 + $0x10] sm:$0xff]
  %v24 = vld [vmem:[%s0 + $0x18] sm:$0xff]
  %v25 = vld [vmem:[%s0 + $0x20] sm:$0xff]
  %v26 = vld [vmem:[%s0 + $0x28] sm:$0xff]
  %v27 = vld [vmem:[%s0 + $0x30] sm:$0xff]
  %v28 = vld [vmem:[%s0 + $0x38] sm:$0xff]
  %v29 = vld [vmem:[%s0 + $0x40] sm:$0xff]
  %v30 = vld [vmem:[%s0 + $0x48] sm:$0xff]
  %v31 = vld [vmem:[%s0 + $0x50] sm:$0xff]
  %v32 = vld [vmem:[%s0 + $0x58] sm:$0xff]
  %v33 = vld [vmem:[%s0 + $0x60] sm:$0xff]
  %v34 = vld [vmem:[%s0 + $0x68] sm:$0xff]
  %v35 = vld [vmem:[%s0 + $0x70] sm:$0xff]
  %v36 = vld [vmem:[%s0 + $0x78] sm:$0xff]
  %v37 = vld [vmem:[%s0 + $0x80] sm:$0xff]
  %v38 = vld [vmem:[%s0 + $0x88] sm:$0xff]
  %v39 = vld [vmem:[%s0 + $0x90] sm:$0xff]
  %v40 = vld [vmem:[%s0 + $0x98] sm:$0xff]
  %v41 = vld [vmem:[%s0 + $0xa0] sm:$0xff]
  %v42 = vld [vmem:[%s0 + $0xa8] sm:$0xff]
  %v43 = vld [vmem:[%s0 + $0xb0] sm:$0xff]
  %v44 = vld [vmem:[%s0 + $0xb8] sm:$0xff]
  %v45 = vld [vmem:[%s0 + $0xc0] sm:$0xff]
  %v46 = vld [vmem:[%s0 + $0xc8] sm:$0xff]
  %v47 = vld [vmem:[%s0 + $0xd0] sm:$0xff]
  %v48 = vld [vmem:[%s0 + $0xd8] sm:$0xff]
  %v49 = vld [vmem:[%s0 + $0xe0] sm:$0xff]
  %v50 = vld [vmem:[%s0 + $0xe8] sm:$0xff]
  %v51 = vld [vmem:[%s0 + $0xf0] sm:$0xff]
  %v52 = vld [vmem:[%s0 + $0xf8] sm:$0xff]
  %v53 = vld [vmem:[%s0 + $0x100] sm:$0xff]
  %v54 = vld [vmem:[%s0 + $0x108] sm:$0xff]
  %v55 = vld [vmem:[%s0 + $0x110] sm:$0xff]
  %v56 = vld [vmem:[%s0 + $0x118] sm:$0xff]
  %v57 = vld [vmem:[%s0 + $0x120] sm:$0xff]
  %v58 = vld [vmem:[%s0 + $0x128] sm:$0xff]
  %v59 = vld [vmem:[%s0 + $0x130] sm:$0xff]
  %v60 = vld [vmem:[%s0 + $0x138] sm:$0xff]
  %v61 = vld [vmem:[%s0 + $0x140] sm:$0xff]
  %v62 = vld [vmem:[%s0 + $0x148] sm:$0xff]
  %v63 = vld [vmem:[%s0 + $0x150] sm:$0xff]
  %v64 = vld [vmem:[%s0 + $0x158] sm:$0xff]
  %v65 = vld [vmem:[%s0 + $0x160] sm:$0xff]
  %v66 = vld [vmem:[%s0 + $0x168] sm:$0xff]
  %v67 = vld [vmem:[%s0 + $0x170] sm:$0xff]
  %v68 = vld [vmem:[%s0 + $0x178] sm:$0xff]
  %v69 = vld [vmem:[%s0 + $0x180] sm:$0xff]
  %v70 = vld [vmem:[%s0 + $0x188] sm:$0xff]
  %v71 = vld [vmem:[%s0 + $0x190] sm:$0xff]
  %v72 = vld [vmem:[%s0 + $0x198] sm:$0xff]
  %v73 = vld [vmem:[%s0 + $0x1a0] sm:$0xff]
  %v74 = vld [vmem:[%s0 + $0x1a8] sm:$0xff]
  %v75 = vld [vmem:[%s0 + $0x1b0] sm:$0xff]
  %v76 = vld [vmem:[%s0 + $0x1b8] sm:$0xff]
  %v77 = vld [vmem:[%s0 + $0x1c0] sm:$0xff]
  %v78 = vld [vmem:[%s0 + $0x1c8] sm:$0xff]
  %v79 = vld [vmem:[%s0 + $0x1d0] sm:$0xff]
  %v80 = vld [vmem:[%s0 + $0x1d8] sm:$0xff]
  %v81 = vld [vmem:[%s0 + $0x1e0] sm:$0xff]
  %v82 = vld [vmem:[%s0 + $0x1e8] sm:$0xff]
  %v83 = vld [vmem:[%s0 + $0x1f0] sm:$0xff]
  %v84 = vld [vmem:[%s0 + $0x1f8] sm:$0xff]
  %v85 = vld [vmem:[%s0 + $0x200] sm:$0xff]
  %v86 = vld [vmem:[%s0 + $0x208] sm:$0xff]
  %v87 = vld [vmem:[%s0 + $0x210] sm:$0xff]
  %v88 = vld [vmem:[%s0 + $0x218] sm:$0xff]
  %v89 = vld [vmem:[%s0 + $0x220] sm:$0xff]
  %v90 = vld [vmem:[%s0 + $0x228] sm:$0xff]
  %v91 = vld [vmem:[%s0 + $0x230] sm:$0xff]
  %v92 = vld [vmem:[%s0 + $0x238] sm:$0xff]
  %v93 = vld [vmem:[%s1] sm:$0x3]
  %95 = vset.pattern.permute.xlu0 0
  %96 = vperm.xlu0 %95, %v21
  %v97 = vpop.permute.xlu0 %96
  %100 = vset.pattern.permute.xlu0 0
  %101 = vperm.xlu0 %100, %v22
  %v102 = vpop.permute.xlu0 %101
  %105 = vset.pattern.permute.xlu0 0
  %106 = vperm.xlu0 %105, %v23
  %v107 = vpop.permute.xlu0 %106
  %110 = vset.pattern.permute.xlu0 0
  %111 = vperm.xlu0 %110, %v24
  %v112 = vpop.permute.xlu0 %111
  %115 = vset.pattern.permute.xlu0 0
  %116 = vperm.xlu0 %115, %v25
  %v117 = vpop.permute.xlu0 %116
  %120 = vset.pattern.permute.xlu0 0
  %121 = vperm.xlu0 %120, %v26
  %v122 = vpop.permute.xlu0 %121
  %125 = vset.pattern.permute.xlu0 0
  %126 = vperm.xlu0 %125, %v27
  %v127 = vpop.permute.xlu0 %126
  %130 = vset.pattern.permute.xlu0 0
  %131 = vperm.xlu0 %130, %v28
  %v132 = vpop.permute.xlu0 %131
  %135 = vset.pattern.permute.xlu0 0
  %136 = vperm.xlu0 %135, %v29
  %v137 = vpop.permute.xlu0 %136
  %140 = vset.pattern.permute.xlu0 0
  %141 = vperm.xlu0 %140, %v30
  %v142 = vpop.permute.xlu0 %141
  %145 = vset.pattern.permute.xlu0 0
  %146 = vperm.xlu0 %145, %v31
  %v147 = vpop.permute.xlu0 %146
  %150 = vset.pattern.permute.xlu0 0
  %151 = vperm.xlu0 %150, %v32
  %v152 = vpop.permute.xlu0 %151
  %155 = vset.pattern.permute.xlu0 0
  %156 = vperm.xlu0 %155, %v33
  %v157 = vpop.permute.xlu0 %156
  %160 = vset.pattern.permute.xlu0 0
  %161 = vperm.xlu0 %160, %v34
  %v162 = vpop.permute.xlu0 %161
  %165 = vset.pattern.permute.xlu0 0
  %166 = vperm.xlu0 %165, %v35
  %v167 = vpop.permute.xlu0 %166
  %170 = vset.pattern.permute.xlu0 0
  %171 = vperm.xlu0 %170, %v36
  %v172 = vpop.permute.xlu0 %171
  %175 = vset.pattern.permute.xlu0 0
  %176 = vperm.xlu0 %175, %v37
  %v177 = vpop.permute.xlu0 %176
  %180 = vset.pattern.permute.xlu0 0
  %181 = vperm.xlu0 %180, %v38
  %v182 = vpop.permute.xlu0 %181
  %185 = vset.pattern.permute.xlu0 0
  %186 = vperm.xlu0 %185, %v39
  %v187 = vpop.permute.xlu0 %186
  %190 = vset.pattern.permute.xlu0 0
  %191 = vperm.xlu0 %190, %v40
  %v192 = vpop.permute.xlu0 %191
  %195 = vset.pattern.permute.xlu0 0
  %196 = vperm.xlu0 %195, %v41
  %v197 = vpop.permute.xlu0 %196
  %200 = vset.pattern.permute.xlu0 0
  %201 = vperm.xlu0 %200, %v42
  %v202 = vpop.permute.xlu0 %201
  %205 = vset.pattern.permute.xlu0 0
  %206 = vperm.xlu0 %205, %v43
  %v207 = vpop.permute.xlu0 %206
  %210 = vset.pattern.permute.xlu0 0
  %211 = vperm.xlu0 %210, %v44
  %v212 = vpop.permute.xlu0 %211
  %215 = vset.pattern.permute.xlu0 0
  %216 = vperm.xlu0 %215, %v45
  %v217 = vpop.permute.xlu0 %216
  %220 = vset.pattern.permute.xlu0 0
  %221 = vperm.xlu0 %220, %v46
  %v222 = vpop.permute.xlu0 %221
  %225 = vset.pattern.permute.xlu0 0
  %226 = vperm.xlu0 %225, %v47
  %v227 = vpop.permute.xlu0 %226
  %230 = vset.pattern.permute.xlu0 0
  %231 = vperm.xlu0 %230, %v48
  %v232 = vpop.permute.xlu0 %231
  %235 = vset.pattern.permute.xlu0 0
  %236 = vperm.xlu0 %235, %v49
  %v237 = vpop.permute.xlu0 %236
  %240 = vset.pattern.permute.xlu0 0
  %241 = vperm.xlu0 %240, %v50
  %v242 = vpop.permute.xlu0 %241
  %245 = vset.pattern.permute.xlu0 0
  %246 = vperm.xlu0 %245, %v51
  %v247 = vpop.permute.xlu0 %246
  %250 = vset.pattern.permute.xlu0 0
  %251 = vperm.xlu0 %250, %v52
  %v252 = vpop.permute.xlu0 %251
  %255 = vset.pattern.permute.xlu0 0
  %256 = vperm.xlu0 %255, %v53
  %v257 = vpop.permute.xlu0 %256
  %260 = vset.pattern.permute.xlu0 0
  %261 = vperm.xlu0 %260, %v54
  %v262 = vpop.permute.xlu0 %261
  %265 = vset.pattern.permute.xlu0 0
  %266 = vperm.xlu0 %265, %v55
  %v267 = vpop.permute.xlu0 %266
  %270 = vset.pattern.permute.xlu0 0
  %271 = vperm.xlu0 %270, %v56
  %v272 = vpop.permute.xlu0 %271
  %275 = vset.pattern.permute.xlu0 0
  %276 = vperm.xlu0 %275, %v57
  %v277 = vpop.permute.xlu0 %276
  %280 = vset.pattern.permute.xlu0 0
  %281 = vperm.xlu0 %280, %v58
  %v282 = vpop.permute.xlu0 %281
  %285 = vset.pattern.permute.xlu0 0
  %286 = vperm.xlu0 %285, %v59
  %v287 = vpop.permute.xlu0 %286
  %290 = vset.pattern.permute.xlu0 0
  %291 = vperm.xlu0 %290, %v60
  %v292 = vpop.permute.xlu0 %291
  %295 = vset.pattern.permute.xlu0 0
  %296 = vperm.xlu0 %295, %v61
  %v297 = vpop.permute.xlu0 %296
  %300 = vset.pattern.permute.xlu0 0
  %301 = vperm.xlu0 %300, %v62
  %v302 = vpop.permute.xlu0 %301
  %305 = vset.pattern.permute.xlu0 0
  %306 = vperm.xlu0 %305, %v63
  %v307 = vpop.permute.xlu0 %306
  %310 = vset.pattern.permute.xlu0 0
  %311 = vperm.xlu0 %310, %v64
  %v312 = vpop.permute.xlu0 %311
  %315 = vset.pattern.permute.xlu0 0
  %316 = vperm.xlu0 %315, %v65
  %v317 = vpop.permute.xlu0 %316
  %320 = vset.pattern.permute.xlu0 0
  %321 = vperm.xlu0 %320, %v66
  %v322 = vpop.permute.xlu0 %321
  %325 = vset.pattern.permute.xlu0 0
  %326 = vperm.xlu0 %325, %v67
  %v327 = vpop.permute.xlu0 %326
  %330 = vset.pattern.permute.xlu0 0
  %331 = vperm.xlu0 %330, %v68
  %v332 = vpop.permute.xlu0 %331
  %335 = vset.pattern.permute.xlu0 0
  %336 = vperm.xlu0 %335, %v69
  %v337 = vpop.permute.xlu0 %336
  %340 = vset.pattern.permute.xlu0 0
  %341 = vperm.xlu0 %340, %v70
  %v342 = vpop.permute.xlu0 %341
  %345 = vset.pattern.permute.xlu0 0
  %346 = vperm.xlu0 %345, %v71
  %v347 = vpop.permute.xlu0 %346
  %350 = vset.pattern.permute.xlu0 0
  %351 = vperm.xlu0 %350, %v72
  %v352 = vpop.permute.xlu0 %351
  %355 = vset.pattern.permute.xlu0 0
  %356 = vperm.xlu0 %355, %v73
  %v357 = vpop.permute.xlu0 %356
  %360 = vset.pattern.permute.xlu0 0
  %361 = vperm.xlu0 %360, %v74
  %v362 = vpop.permute.xlu0 %361
  %365 = vset.pattern.permute.xlu0 0
  %366 = vperm.xlu0 %365, %v75
  %v367 = vpop.permute.xlu0 %366
  %370 = vset.pattern.permute.xlu0 0
  %371 = vperm.xlu0 %370, %v76
  %v372 = vpop.permute.xlu0 %371
  %375 = vset.pattern.permute.xlu0 0
  %376 = vperm.xlu0 %375, %v77
  %v377 = vpop.permute.xlu0 %376
  %380 = vset.pattern.permute.xlu0 0
  %381 = vperm.xlu0 %380, %v78
  %v382 = vpop.permute.xlu0 %381
  %385 = vset.pattern.permute.xlu0 0
  %386 = vperm.xlu0 %385, %v79
  %v387 = vpop.permute.xlu0 %386
  %390 = vset.pattern.permute.xlu0 0
  %391 = vperm.xlu0 %390, %v80
  %v392 = vpop.permute.xlu0 %391
  %395 = vset.pattern.permute.xlu0 0
  %396 = vperm.xlu0 %395, %v81
  %v397 = vpop.permute.xlu0 %396
  %400 = vset.pattern.permute.xlu0 0
  %401 = vperm.xlu0 %400, %v82
  %v402 = vpop.permute.xlu0 %401
  %405 = vset.pattern.permute.xlu0 0
  %406 = vperm.xlu0 %405, %v83
  %v407 = vpop.permute.xlu0 %406
  %410 = vset.pattern.permute.xlu0 0
  %411 = vperm.xlu0 %410, %v84
  %v412 = vpop.permute.xlu0 %411
  %415 = vset.pattern.permute.xlu0 0
  %416 = vperm.xlu0 %415, %v85
  %v417 = vpop.permute.xlu0 %416
  %420 = vset.pattern.permute.xlu0 0
  %421 = vperm.xlu0 %420, %v86
  %v422 = vpop.permute.xlu0 %421
  %425 = vset.pattern.permute.xlu0 0
  %426 = vperm.xlu0 %425, %v87
  %v427 = vpop.permute.xlu0 %426
  %430 = vset.pattern.permute.xlu0 0
  %431 = vperm.xlu0 %430, %v88
  %v432 = vpop.permute.xlu0 %431
  %435 = vset.pattern.permute.xlu0 0
  %436 = vperm.xlu0 %435, %v89
  %v437 = vpop.permute.xlu0 %436
  %440 = vset.pattern.permute.xlu0 0
  %441 = vperm.xlu0 %440, %v90
  %v442 = vpop.permute.xlu0 %441
  %445 = vset.pattern.permute.xlu0 0
  %446 = vperm.xlu0 %445, %v91
  %v447 = vpop.permute.xlu0 %446
  %450 = vset.pattern.permute.xlu0 0
  %451 = vperm.xlu0 %450, %v92
  %v452 = vpop.permute.xlu0 %451
  %v454 = vlaneseq
  %v455 = vshrl.u32 %v454, 7
  %v456 = vsub.s32 0, %v455
  %v457 = vrot.slane %v93, %v456
  %v458 = vmul.f32 %v97, %v457
  %v459 = vmul.f32 %v102, %v457
  %v460 = vmul.f32 %v107, %v457
  %v461 = vmul.f32 %v112, %v457
  %v462 = vmul.f32 %v117, %v457
  %v463 = vmul.f32 %v122, %v457
  %v464 = vmul.f32 %v127, %v457
  %v465 = vmul.f32 %v132, %v457
  %v466 = vmul.f32 %v137, %v457
  %v467 = vmul.f32 %v142, %v457
  %v468 = vmul.f32 %v147, %v457
  %v469 = vmul.f32 %v152, %v457
  %v470 = vmul.f32 %v157, %v457
  %v471 = vmul.f32 %v162, %v457
  %v472 = vmul.f32 %v167, %v457
  %v473 = vmul.f32 %v172, %v457
  %v474 = vmul.f32 %v177, %v457
  %v475 = vmul.f32 %v182, %v457
  %v476 = vmul.f32 %v187, %v457
  %v477 = vmul.f32 %v192, %v457
  %v478 = vmul.f32 %v197, %v457
  %v479 = vmul.f32 %v202, %v457
  %v480 = vmul.f32 %v207, %v457
  %v481 = vmul.f32 %v212, %v457
  %v482 = vmul.f32 %v217, %v457
  %v483 = vmul.f32 %v222, %v457
  %v484 = vmul.f32 %v227, %v457
  %v485 = vmul.f32 %v232, %v457
  %v486 = vmul.f32 %v237, %v457
  %v487 = vmul.f32 %v242, %v457
  %v488 = vmul.f32 %v247, %v457
  %v489 = vmul.f32 %v252, %v457
  %v490 = vmul.f32 %v257, %v457
  %v491 = vmul.f32 %v262, %v457
  %v492 = vmul.f32 %v267, %v457
  %v493 = vmul.f32 %v272, %v457
  %v494 = vmul.f32 %v277, %v457
  %v495 = vmul.f32 %v282, %v457
  %v496 = vmul.f32 %v287, %v457
  %v497 = vmul.f32 %v292, %v457
  %v498 = vmul.f32 %v297, %v457
  %v499 = vmul.f32 %v302, %v457
  %v500 = vmul.f32 %v307, %v457
  %v501 = vmul.f32 %v312, %v457
  %v502 = vmul.f32 %v317, %v457
  %v503 = vmul.f32 %v322, %v457
  %v504 = vmul.f32 %v327, %v457
  %v505 = vmul.f32 %v332, %v457
  %v506 = vmul.f32 %v337, %v457
  %v507 = vmul.f32 %v342, %v457
  %v508 = vmul.f32 %v347, %v457
  %v509 = vmul.f32 %v352, %v457
  %v510 = vmul.f32 %v357, %v457
  %v511 = vmul.f32 %v362, %v457
  %v512 = vmul.f32 %v367, %v457
  %v513 = vmul.f32 %v372, %v457
  %v514 = vmul.f32 %v377, %v457
  %v515 = vmul.f32 %v382, %v457
  %v516 = vmul.f32 %v387, %v457
  %v517 = vmul.f32 %v392, %v457
  %v518 = vmul.f32 %v397, %v457
  %v519 = vmul.f32 %v402, %v457
  %v520 = vmul.f32 %v407, %v457
  %v521 = vmul.f32 %v412, %v457
  %v522 = vmul.f32 %v417, %v457
  %v523 = vmul.f32 %v422, %v457
  %v524 = vmul.f32 %v427, %v457
  %v525 = vmul.f32 %v432, %v457
  %v526 = vmul.f32 %v437, %v457
  %v527 = vmul.f32 %v442, %v457
  %v528 = vmul.f32 %v447, %v457
  %v529 = vmul.f32 %v452, %v457
  %530 = vset.pattern.permute.xlu0 1
  %531 = vperm.xlu0 %530, %v21
  %v532 = vpop.permute.xlu0 %531
  %534 = vset.pattern.permute.xlu0 1
  %535 = vperm.xlu0 %534, %v22
  %v536 = vpop.permute.xlu0 %535
  %538 = vset.pattern.permute.xlu0 1
  %539 = vperm.xlu0 %538, %v23
  %v540 = vpop.permute.xlu0 %539
  %542 = vset.pattern.permute.xlu0 1
  %543 = vperm.xlu0 %542, %v24
  %v544 = vpop.permute.xlu0 %543
  %546 = vset.pattern.permute.xlu0 1
  %547 = vperm.xlu0 %546, %v25
  %v548 = vpop.permute.xlu0 %547
  %550 = vset.pattern.permute.xlu0 1
  %551 = vperm.xlu0 %550, %v26
  %v552 = vpop.permute.xlu0 %551
  %554 = vset.pattern.permute.xlu0 1
  %555 = vperm.xlu0 %554, %v27
  %v556 = vpop.permute.xlu0 %555
  %558 = vset.pattern.permute.xlu0 1
  %559 = vperm.xlu0 %558, %v28
  %v560 = vpop.permute.xlu0 %559
  %562 = vset.pattern.permute.xlu0 1
  %563 = vperm.xlu0 %562, %v29
  %v564 = vpop.permute.xlu0 %563
  %566 = vset.pattern.permute.xlu0 1
  %567 = vperm.xlu0 %566, %v30
  %v568 = vpop.permute.xlu0 %567
  %570 = vset.pattern.permute.xlu0 1
  %571 = vperm.xlu0 %570, %v31
  %v572 = vpop.permute.xlu0 %571
  %574 = vset.pattern.permute.xlu0 1
  %575 = vperm.xlu0 %574, %v32
  %v576 = vpop.permute.xlu0 %575
  %578 = vset.pattern.permute.xlu0 1
  %579 = vperm.xlu0 %578, %v33
  %v580 = vpop.permute.xlu0 %579
  %582 = vset.pattern.permute.xlu0 1
  %583 = vperm.xlu0 %582, %v34
  %v584 = vpop.permute.xlu0 %583
  %586 = vset.pattern.permute.xlu0 1
  %587 = vperm.xlu0 %586, %v35
  %v588 = vpop.permute.xlu0 %587
  %590 = vset.pattern.permute.xlu0 1
  %591 = vperm.xlu0 %590, %v36
  %v592 = vpop.permute.xlu0 %591
  %594 = vset.pattern.permute.xlu0 1
  %595 = vperm.xlu0 %594, %v37
  %v596 = vpop.permute.xlu0 %595
  %598 = vset.pattern.permute.xlu0 1
  %599 = vperm.xlu0 %598, %v38
  %v600 = vpop.permute.xlu0 %599
  %602 = vset.pattern.permute.xlu0 1
  %603 = vperm.xlu0 %602, %v39
  %v604 = vpop.permute.xlu0 %603
  %606 = vset.pattern.permute.xlu0 1
  %607 = vperm.xlu0 %606, %v40
  %v608 = vpop.permute.xlu0 %607
  %610 = vset.pattern.permute.xlu0 1
  %611 = vperm.xlu0 %610, %v41
  %v612 = vpop.permute.xlu0 %611
  %614 = vset.pattern.permute.xlu0 1
  %615 = vperm.xlu0 %614, %v42
  %v616 = vpop.permute.xlu0 %615
  %618 = vset.pattern.permute.xlu0 1
  %619 = vperm.xlu0 %618, %v43
  %v620 = vpop.permute.xlu0 %619
  %622 = vset.pattern.permute.xlu0 1
  %623 = vperm.xlu0 %622, %v44
  %v624 = vpop.permute.xlu0 %623
  %626 = vset.pattern.permute.xlu0 1
  %627 = vperm.xlu0 %626, %v45
  %v628 = vpop.permute.xlu0 %627
  %630 = vset.pattern.permute.xlu0 1
  %631 = vperm.xlu0 %630, %v46
  %v632 = vpop.permute.xlu0 %631
  %634 = vset.pattern.permute.xlu0 1
  %635 = vperm.xlu0 %634, %v47
  %v636 = vpop.permute.xlu0 %635
  %638 = vset.pattern.permute.xlu0 1
  %639 = vperm.xlu0 %638, %v48
  %v640 = vpop.permute.xlu0 %639
  %642 = vset.pattern.permute.xlu0 1
  %643 = vperm.xlu0 %642, %v49
  %v644 = vpop.permute.xlu0 %643
  %646 = vset.pattern.permute.xlu0 1
  %647 = vperm.xlu0 %646, %v50
  %v648 = vpop.permute.xlu0 %647
  %650 = vset.pattern.permute.xlu0 1
  %651 = vperm.xlu0 %650, %v51
  %v652 = vpop.permute.xlu0 %651
  %654 = vset.pattern.permute.xlu0 1
  %655 = vperm.xlu0 %654, %v52
  %v656 = vpop.permute.xlu0 %655
  %658 = vset.pattern.permute.xlu0 1
  %659 = vperm.xlu0 %658, %v53
  %v660 = vpop.permute.xlu0 %659
  %662 = vset.pattern.permute.xlu0 1
  %663 = vperm.xlu0 %662, %v54
  %v664 = vpop.permute.xlu0 %663
  %666 = vset.pattern.permute.xlu0 1
  %667 = vperm.xlu0 %666, %v55
  %v668 = vpop.permute.xlu0 %667
  %670 = vset.pattern.permute.xlu0 1
  %671 = vperm.xlu0 %670, %v56
  %v672 = vpop.permute.xlu0 %671
  %674 = vset.pattern.permute.xlu0 1
  %675 = vperm.xlu0 %674, %v57
  %v676 = vpop.permute.xlu0 %675
  %678 = vset.pattern.permute.xlu0 1
  %679 = vperm.xlu0 %678, %v58
  %v680 = vpop.permute.xlu0 %679
  %682 = vset.pattern.permute.xlu0 1
  %683 = vperm.xlu0 %682, %v59
  %v684 = vpop.permute.xlu0 %683
  %686 = vset.pattern.permute.xlu0 1
  %687 = vperm.xlu0 %686, %v60
  %v688 = vpop.permute.xlu0 %687
  %690 = vset.pattern.permute.xlu0 1
  %691 = vperm.xlu0 %690, %v61
  %v692 = vpop.permute.xlu0 %691
  %694 = vset.pattern.permute.xlu0 1
  %695 = vperm.xlu0 %694, %v62
  %v696 = vpop.permute.xlu0 %695
  %698 = vset.pattern.permute.xlu0 1
  %699 = vperm.xlu0 %698, %v63
  %v700 = vpop.permute.xlu0 %699
  %702 = vset.pattern.permute.xlu0 1
  %703 = vperm.xlu0 %702, %v64
  %v704 = vpop.permute.xlu0 %703
  %706 = vset.pattern.permute.xlu0 1
  %707 = vperm.xlu0 %706, %v65
  %v708 = vpop.permute.xlu0 %707
  %710 = vset.pattern.permute.xlu0 1
  %711 = vperm.xlu0 %710, %v66
  %v712 = vpop.permute.xlu0 %711
  %714 = vset.pattern.permute.xlu0 1
  %715 = vperm.xlu0 %714, %v67
  %v716 = vpop.permute.xlu0 %715
  %718 = vset.pattern.permute.xlu0 1
  %719 = vperm.xlu0 %718, %v68
  %v720 = vpop.permute.xlu0 %719
  %722 = vset.pattern.permute.xlu0 1
  %723 = vperm.xlu0 %722, %v69
  %v724 = vpop.permute.xlu0 %723
  %726 = vset.pattern.permute.xlu0 1
  %727 = vperm.xlu0 %726, %v70
  %v728 = vpop.permute.xlu0 %727
  %730 = vset.pattern.permute.xlu0 1
  %731 = vperm.xlu0 %730, %v71
  %v732 = vpop.permute.xlu0 %731
  %734 = vset.pattern.permute.xlu0 1
  %735 = vperm.xlu0 %734, %v72
  %v736 = vpop.permute.xlu0 %735
  %738 = vset.pattern.permute.xlu0 1
  %739 = vperm.xlu0 %738, %v73
  %v740 = vpop.permute.xlu0 %739
  %742 = vset.pattern.permute.xlu0 1
  %743 = vperm.xlu0 %742, %v74
  %v744 = vpop.permute.xlu0 %743
  %746 = vset.pattern.permute.xlu0 1
  %747 = vperm.xlu0 %746, %v75
  %v748 = vpop.permute.xlu0 %747
  %750 = vset.pattern.permute.xlu0 1
  %751 = vperm.xlu0 %750, %v76
  %v752 = vpop.permute.xlu0 %751
  %754 = vset.pattern.permute.xlu0 1
  %755 = vperm.xlu0 %754, %v77
  %v756 = vpop.permute.xlu0 %755
  %758 = vset.pattern.permute.xlu0 1
  %759 = vperm.xlu0 %758, %v78
  %v760 = vpop.permute.xlu0 %759
  %762 = vset.pattern.permute.xlu0 1
  %763 = vperm.xlu0 %762, %v79
  %v764 = vpop.permute.xlu0 %763
  %766 = vset.pattern.permute.xlu0 1
  %767 = vperm.xlu0 %766, %v80
  %v768 = vpop.permute.xlu0 %767
  %770 = vset.pattern.permute.xlu0 1
  %771 = vperm.xlu0 %770, %v81
  %v772 = vpop.permute.xlu0 %771
  %774 = vset.pattern.permute.xlu0 1
  %775 = vperm.xlu0 %774, %v82
  %v776 = vpop.permute.xlu0 %775
  %778 = vset.pattern.permute.xlu0 1
  %779 = vperm.xlu0 %778, %v83
  %v780 = vpop.permute.xlu0 %779
  %782 = vset.pattern.permute.xlu0 1
  %783 = vperm.xlu0 %782, %v84
  %v784 = vpop.permute.xlu0 %783
  %786 = vset.pattern.permute.xlu0 1
  %787 = vperm.xlu0 %786, %v85
  %v788 = vpop.permute.xlu0 %787
  %790 = vset.pattern.permute.xlu0 1
  %791 = vperm.xlu0 %790, %v86
  %v792 = vpop.permute.xlu0 %791
  %794 = vset.pattern.permute.xlu0 1
  %795 = vperm.xlu0 %794, %v87
  %v796 = vpop.permute.xlu0 %795
  %798 = vset.pattern.permute.xlu0 1
  %799 = vperm.xlu0 %798, %v88
  %v800 = vpop.permute.xlu0 %799
  %802 = vset.pattern.permute.xlu0 1
  %803 = vperm.xlu0 %802, %v89
  %v804 = vpop.permute.xlu0 %803
  %806 = vset.pattern.permute.xlu0 1
  %807 = vperm.xlu0 %806, %v90
  %v808 = vpop.permute.xlu0 %807
  %810 = vset.pattern.permute.xlu0 1
  %811 = vperm.xlu0 %810, %v91
  %v812 = vpop.permute.xlu0 %811
  %814 = vset.pattern.permute.xlu0 1
  %815 = vperm.xlu0 %814, %v92
  %v816 = vpop.permute.xlu0 %815
  %v818 = vlaneseq
  %v819 = vshrl.u32 %v818, 7
  %v820 = vsub.s32 1, %v819
  %v821 = vrot.slane %v93, %v820
  %v822 = vmul.f32 %v532, %v821
  %v823 = vmul.f32 %v536, %v821
  %v824 = vmul.f32 %v540, %v821
  %v825 = vmul.f32 %v544, %v821
  %v826 = vmul.f32 %v548, %v821
  %v827 = vmul.f32 %v552, %v821
  %v828 = vmul.f32 %v556, %v821
  %v829 = vmul.f32 %v560, %v821
  %v830 = vmul.f32 %v564, %v821
  %v831 = vmul.f32 %v568, %v821
  %v832 = vmul.f32 %v572, %v821
  %v833 = vmul.f32 %v576, %v821
  %v834 = vmul.f32 %v580, %v821
  %v835 = vmul.f32 %v584, %v821
  %v836 = vmul.f32 %v588, %v821
  %v837 = vmul.f32 %v592, %v821
  %v838 = vmul.f32 %v596, %v821
  %v839 = vmul.f32 %v600, %v821
  %v840 = vmul.f32 %v604, %v821
  %v841 = vmul.f32 %v608, %v821
  %v842 = vmul.f32 %v612, %v821
  %v843 = vmul.f32 %v616, %v821
  %v844 = vmul.f32 %v620, %v821
  %v845 = vmul.f32 %v624, %v821
  %v846 = vmul.f32 %v628, %v821
  %v847 = vmul.f32 %v632, %v821
  %v848 = vmul.f32 %v636, %v821
  %v849 = vmul.f32 %v640, %v821
  %v850 = vmul.f32 %v644, %v821
  %v851 = vmul.f32 %v648, %v821
  %v852 = vmul.f32 %v652, %v821
  %v853 = vmul.f32 %v656, %v821
  %v854 = vmul.f32 %v660, %v821
  %v855 = vmul.f32 %v664, %v821
  %v856 = vmul.f32 %v668, %v821
  %v857 = vmul.f32 %v672, %v821
  %v858 = vmul.f32 %v676, %v821
  %v859 = vmul.f32 %v680, %v821
  %v860 = vmul.f32 %v684, %v821
  %v861 = vmul.f32 %v688, %v821
  %v862 = vmul.f32 %v692, %v821
  %v863 = vmul.f32 %v696, %v821
  %v864 = vmul.f32 %v700, %v821
  %v865 = vmul.f32 %v704, %v821
  %v866 = vmul.f32 %v708, %v821
  %v867 = vmul.f32 %v712, %v821
  %v868 = vmul.f32 %v716, %v821
  %v869 = vmul.f32 %v720, %v821
  %v870 = vmul.f32 %v724, %v821
  %v871 = vmul.f32 %v728, %v821
  %v872 = vmul.f32 %v732, %v821
  %v873 = vmul.f32 %v736, %v821
  %v874 = vmul.f32 %v740, %v821
  %v875 = vmul.f32 %v744, %v821
  %v876 = vmul.f32 %v748, %v821
  %v877 = vmul.f32 %v752, %v821
  %v878 = vmul.f32 %v756, %v821
  %v879 = vmul.f32 %v760, %v821
  %v880 = vmul.f32 %v764, %v821
  %v881 = vmul.f32 %v768, %v821
  %v882 = vmul.f32 %v772, %v821
  %v883 = vmul.f32 %v776, %v821
  %v884 = vmul.f32 %v780, %v821
  %v885 = vmul.f32 %v784, %v821
  %v886 = vmul.f32 %v788, %v821
  %v887 = vmul.f32 %v792, %v821
  %v888 = vmul.f32 %v796, %v821
  %v889 = vmul.f32 %v800, %v821
  %v890 = vmul.f32 %v804, %v821
  %v891 = vmul.f32 %v808, %v821
  %v892 = vmul.f32 %v812, %v821
  %v893 = vmul.f32 %v816, %v821
  %v894 = vadd.f32 %v458, %v822
  %v895 = vadd.f32 %v459, %v823
  %v896 = vadd.f32 %v460, %v824
  %v897 = vadd.f32 %v461, %v825
  %v898 = vadd.f32 %v462, %v826
  %v899 = vadd.f32 %v463, %v827
  %v900 = vadd.f32 %v464, %v828
  %v901 = vadd.f32 %v465, %v829
  %v902 = vadd.f32 %v466, %v830
  %v903 = vadd.f32 %v467, %v831
  %v904 = vadd.f32 %v468, %v832
  %v905 = vadd.f32 %v469, %v833
  %v906 = vadd.f32 %v470, %v834
  %v907 = vadd.f32 %v471, %v835
  %v908 = vadd.f32 %v472, %v836
  %v909 = vadd.f32 %v473, %v837
  %v910 = vadd.f32 %v474, %v838
  %v911 = vadd.f32 %v475, %v839
  %v912 = vadd.f32 %v476, %v840
  %v913 = vadd.f32 %v477, %v841
  %v914 = vadd.f32 %v478, %v842
  %v915 = vadd.f32 %v479, %v843
  %v916 = vadd.f32 %v480, %v844
  %v917 = vadd.f32 %v481, %v845
  %v918 = vadd.f32 %v482, %v846
  %v919 = vadd.f32 %v483, %v847
  %v920 = vadd.f32 %v484, %v848
  %v921 = vadd.f32 %v485, %v849
  %v922 = vadd.f32 %v486, %v850
  %v923 = vadd.f32 %v487, %v851
  %v924 = vadd.f32 %v488, %v852
  %v925 = vadd.f32 %v489, %v853
  %v926 = vadd.f32 %v490, %v854
  %v927 = vadd.f32 %v491, %v855
  %v928 = vadd.f32 %v492, %v856
  %v929 = vadd.f32 %v493, %v857
  %v930 = vadd.f32 %v494, %v858
  %v931 = vadd.f32 %v495, %v859
  %v932 = vadd.f32 %v496, %v860
  %v933 = vadd.f32 %v497, %v861
  %v934 = vadd.f32 %v498, %v862
  %v935 = vadd.f32 %v499, %v863
  %v936 = vadd.f32 %v500, %v864
  %v937 = vadd.f32 %v501, %v865
  %v938 = vadd.f32 %v502, %v866
  %v939 = vadd.f32 %v503, %v867
  %v940 = vadd.f32 %v504, %v868
  %v941 = vadd.f32 %v505, %v869
  %v942 = vadd.f32 %v506, %v870
  %v943 = vadd.f32 %v507, %v871
  %v944 = vadd.f32 %v508, %v872
  %v945 = vadd.f32 %v509, %v873
  %v946 = vadd.f32 %v510, %v874
  %v947 = vadd.f32 %v511, %v875
  %v948 = vadd.f32 %v512, %v876
  %v949 = vadd.f32 %v513, %v877
  %v950 = vadd.f32 %v514, %v878
  %v951 = vadd.f32 %v515, %v879
  %v952 = vadd.f32 %v516, %v880
  %v953 = vadd.f32 %v517, %v881
  %v954 = vadd.f32 %v518, %v882
  %v955 = vadd.f32 %v519, %v883
  %v956 = vadd.f32 %v520, %v884
  %v957 = vadd.f32 %v521, %v885
  %v958 = vadd.f32 %v522, %v886
  %v959 = vadd.f32 %v523, %v887
  %v960 = vadd.f32 %v524, %v888
  %v961 = vadd.f32 %v525, %v889
  %v962 = vadd.f32 %v526, %v890
  %v963 = vadd.f32 %v527, %v891
  %v964 = vadd.f32 %v528, %v892
  %v965 = vadd.f32 %v529, %v893
  %v966 = vld [vmem:[%s2] sm:$0x1]
  %v968 = vlaneseq
  %v969 = vshrl.u32 %v968, 7
  %v970 = vsub.s32 0, %v969
  %v971 = vrot.slane %v966, %v970
  %v973 = vadd.f32 %v894, %v971
  %v974 = vadd.f32 %v895, %v971
  %v975 = vadd.f32 %v896, %v971
  %v976 = vadd.f32 %v897, %v971
  %v977 = vadd.f32 %v898, %v971
  %v978 = vadd.f32 %v899, %v971
  %v979 = vadd.f32 %v900, %v971
  %v980 = vadd.f32 %v901, %v971
  %v981 = vadd.f32 %v902, %v971
  %v982 = vadd.f32 %v903, %v971
  %v983 = vadd.f32 %v904, %v971
  %v984 = vadd.f32 %v905, %v971
  %v985 = vadd.f32 %v906, %v971
  %v986 = vadd.f32 %v907, %v971
  %v987 = vadd.f32 %v908, %v971
  %v988 = vadd.f32 %v909, %v971
  %v989 = vadd.f32 %v910, %v971
  %v990 = vadd.f32 %v911, %v971
  %v991 = vadd.f32 %v912, %v971
  %v992 = vadd.f32 %v913, %v971
  %v993 = vadd.f32 %v914, %v971
  %v994 = vadd.f32 %v915, %v971
  %v995 = vadd.f32 %v916, %v971
  %v996 = vadd.f32 %v917, %v971
  %v997 = vadd.f32 %v918, %v971
  %v998 = vadd.f32 %v919, %v971
  %v999 = vadd.f32 %v920, %v971
  %v1000 = vadd.f32 %v921, %v971
  %v1001 = vadd.f32 %v922, %v971
  %v1002 = vadd.f32 %v923, %v971
  %v1003 = vadd.f32 %v924, %v971
  %v1004 = vadd.f32 %v925, %v971
  %v1005 = vadd.f32 %v926, %v971
  %v1006 = vadd.f32 %v927, %v971
  %v1007 = vadd.f32 %v928, %v971
  %v1008 = vadd.f32 %v929, %v971
  %v1009 = vadd.f32 %v930, %v971
  %v1010 = vadd.f32 %v931, %v971
  %v1011 = vadd.f32 %v932, %v971
  %v1012 = vadd.f32 %v933, %v971
  %v1013 = vadd.f32 %v934, %v971
  %v1014 = vadd.f32 %v935, %v971
  %v1015 = vadd.f32 %v936, %v971
  %v1016 = vadd.f32 %v937, %v971
  %v1017 = vadd.f32 %v938, %v971
  %v1018 = vadd.f32 %v939, %v971
  %v1019 = vadd.f32 %v940, %v971
  %v1020 = vadd.f32 %v941, %v971
  %v1021 = vadd.f32 %v942, %v971
  %v1022 = vadd.f32 %v943, %v971
  %v1023 = vadd.f32 %v944, %v971
  %v1024 = vadd.f32 %v945, %v971
  %v1025 = vadd.f32 %v946, %v971
  %v1026 = vadd.f32 %v947, %v971
  %v1027 = vadd.f32 %v948, %v971
  %v1028 = vadd.f32 %v949, %v971
  %v1029 = vadd.f32 %v950, %v971
  %v1030 = vadd.f32 %v951, %v971
  %v1031 = vadd.f32 %v952, %v971
  %v1032 = vadd.f32 %v953, %v971
  %v1033 = vadd.f32 %v954, %v971
  %v1034 = vadd.f32 %v955, %v971
  %v1035 = vadd.f32 %v956, %v971
  %v1036 = vadd.f32 %v957, %v971
  %v1037 = vadd.f32 %v958, %v971
  %v1038 = vadd.f32 %v959, %v971
  %v1039 = vadd.f32 %v960, %v971
  %v1040 = vadd.f32 %v961, %v971
  %v1041 = vadd.f32 %v962, %v971
  %v1042 = vadd.f32 %v963, %v971
  %v1043 = vadd.f32 %v964, %v971
  %v1044 = vadd.f32 %v965, %v971
  %v1045 = vmul.f32 %v973, %v973
  %v1046 = vmul.f32 %v974, %v974
  %v1047 = vmul.f32 %v975, %v975
  %v1048 = vmul.f32 %v976, %v976
  %v1049 = vmul.f32 %v977, %v977
  %v1050 = vmul.f32 %v978, %v978
  %v1051 = vmul.f32 %v979, %v979
  %v1052 = vmul.f32 %v980, %v980
  %v1053 = vmul.f32 %v981, %v981
  %v1054 = vmul.f32 %v982, %v982
  %v1055 = vmul.f32 %v983, %v983
  %v1056 = vmul.f32 %v984, %v984
  %v1057 = vmul.f32 %v985, %v985
  %v1058 = vmul.f32 %v986, %v986
  %v1059 = vmul.f32 %v987, %v987
  %v1060 = vmul.f32 %v988, %v988
  %v1061 = vmul.f32 %v989, %v989
  %v1062 = vmul.f32 %v990, %v990
  %v1063 = vmul.f32 %v991, %v991
  %v1064 = vmul.f32 %v992, %v992
  %v1065 = vmul.f32 %v993, %v993
  %v1066 = vmul.f32 %v994, %v994
  %v1067 = vmul.f32 %v995, %v995
  %v1068 = vmul.f32 %v996, %v996
  %v1069 = vmul.f32 %v997, %v997
  %v1070 = vmul.f32 %v998, %v998
  %v1071 = vmul.f32 %v999, %v999
  %v1072 = vmul.f32 %v1000, %v1000
  %v1073 = vmul.f32 %v1001, %v1001
  %v1074 = vmul.f32 %v1002, %v1002
  %v1075 = vmul.f32 %v1003, %v1003
  %v1076 = vmul.f32 %v1004, %v1004
  %v1077 = vmul.f32 %v1005, %v1005
  %v1078 = vmul.f32 %v1006, %v1006
  %v1079 = vmul.f32 %v1007, %v1007
  %v1080 = vmul.f32 %v1008, %v1008
  %v1081 = vmul.f32 %v1009, %v1009
  %v1082 = vmul.f32 %v1010, %v1010
  %v1083 = vmul.f32 %v1011, %v1011
  %v1084 = vmul.f32 %v1012, %v1012
  %v1085 = vmul.f32 %v1013, %v1013
  %v1086 = vmul.f32 %v1014, %v1014
  %v1087 = vmul.f32 %v1015, %v1015
  %v1088 = vmul.f32 %v1016, %v1016
  %v1089 = vmul.f32 %v1017, %v1017
  %v1090 = vmul.f32 %v1018, %v1018
  %v1091 = vmul.f32 %v1019, %v1019
  %v1092 = vmul.f32 %v1020, %v1020
  %v1093 = vmul.f32 %v1021, %v1021
  %v1094 = vmul.f32 %v1022, %v1022
  %v1095 = vmul.f32 %v1023, %v1023
  %v1096 = vmul.f32 %v1024, %v1024
  %v1097 = vmul.f32 %v1025, %v1025
  %v1098 = vmul.f32 %v1026, %v1026
  %v1099 = vmul.f32 %v1027, %v1027
  %v1100 = vmul.f32 %v1028, %v1028
  %v1101 = vmul.f32 %v1029, %v1029
  %v1102 = vmul.f32 %v1030, %v1030
  %v1103 = vmul.f32 %v1031, %v1031
  %v1104 = vmul.f32 %v1032, %v1032
  %v1105 = vmul.f32 %v1033, %v1033
  %v1106 = vmul.f32 %v1034, %v1034
  %v1107 = vmul.f32 %v1035, %v1035
  %v1108 = vmul.f32 %v1036, %v1036
  %v1109 = vmul.f32 %v1037, %v1037
  %v1110 = vmul.f32 %v1038, %v1038
  %v1111 = vmul.f32 %v1039, %v1039
  %v1112 = vmul.f32 %v1040, %v1040
  %v1113 = vmul.f32 %v1041, %v1041
  %v1114 = vmul.f32 %v1042, %v1042
  %v1115 = vmul.f32 %v1043, %v1043
  %v1116 = vmul.f32 %v1044, %v1044
  %v1117 = vmul.f32 %v973, %v1045
  %v1118 = vmul.f32 %v974, %v1046
  %v1119 = vmul.f32 %v975, %v1047
  %v1120 = vmul.f32 %v976, %v1048
  %v1121 = vmul.f32 %v977, %v1049
  %v1122 = vmul.f32 %v978, %v1050
  %v1123 = vmul.f32 %v979, %v1051
  %v1124 = vmul.f32 %v980, %v1052
  %v1125 = vmul.f32 %v981, %v1053
  %v1126 = vmul.f32 %v982, %v1054
  %v1127 = vmul.f32 %v983, %v1055
  %v1128 = vmul.f32 %v984, %v1056
  %v1129 = vmul.f32 %v985, %v1057
  %v1130 = vmul.f32 %v986, %v1058
  %v1131 = vmul.f32 %v987, %v1059
  %v1132 = vmul.f32 %v988, %v1060
  %v1133 = vmul.f32 %v989, %v1061
  %v1134 = vmul.f32 %v990, %v1062
  %v1135 = vmul.f32 %v991, %v1063
  %v1136 = vmul.f32 %v992, %v1064
  %v1137 = vmul.f32 %v993, %v1065
  %v1138 = vmul.f32 %v994, %v1066
  %v1139 = vmul.f32 %v995, %v1067
  %v1140 = vmul.f32 %v996, %v1068
  %v1141 = vmul.f32 %v997, %v1069
  %v1142 = vmul.f32 %v998, %v1070
  %v1143 = vmul.f32 %v999, %v1071
  %v1144 = vmul.f32 %v1000, %v1072
  %v1145 = vmul.f32 %v1001, %v1073
  %v1146 = vmul.f32 %v1002, %v1074
  %v1147 = vmul.f32 %v1003, %v1075
  %v1148 = vmul.f32 %v1004, %v1076
  %v1149 = vmul.f32 %v1005, %v1077
  %v1150 = vmul.f32 %v1006, %v1078
  %v1151 = vmul.f32 %v1007, %v1079
  %v1152 = vmul.f32 %v1008, %v1080
  %v1153 = vmul.f32 %v1009, %v1081
  %v1154 = vmul.f32 %v1010, %v1082
  %v1155 = vmul.f32 %v1011, %v1083
  %v1156 = vmul.f32 %v1012, %v1084
  %v1157 = vmul.f32 %v1013, %v1085
  %v1158 = vmul.f32 %v1014, %v1086
  %v1159 = vmul.f32 %v1015, %v1087
  %v1160 = vmul.f32 %v1016, %v1088
  %v1161 = vmul.f32 %v1017, %v1089
  %v1162 = vmul.f32 %v1018, %v1090
  %v1163 = vmul.f32 %v1019, %v1091
  %v1164 = vmul.f32 %v1020, %v1092
  %v1165 = vmul.f32 %v1021, %v1093
  %v1166 = vmul.f32 %v1022, %v1094
  %v1167 = vmul.f32 %v1023, %v1095
  %v1168 = vmul.f32 %v1024, %v1096
  %v1169 = vmul.f32 %v1025, %v1097
  %v1170 = vmul.f32 %v1026, %v1098
  %v1171 = vmul.f32 %v1027, %v1099
  %v1172 = vmul.f32 %v1028, %v1100
  %v1173 = vmul.f32 %v1029, %v1101
  %v1174 = vmul.f32 %v1030, %v1102
  %v1175 = vmul.f32 %v1031, %v1103
  %v1176 = vmul.f32 %v1032, %v1104
  %v1177 = vmul.f32 %v1033, %v1105
  %v1178 = vmul.f32 %v1034, %v1106
  %v1179 = vmul.f32 %v1035, %v1107
  %v1180 = vmul.f32 %v1036, %v1108
  %v1181 = vmul.f32 %v1037, %v1109
  %v1182 = vmul.f32 %v1038, %v1110
  %v1183 = vmul.f32 %v1039, %v1111
  %v1184 = vmul.f32 %v1040, %v1112
  %v1185 = vmul.f32 %v1041, %v1113
  %v1186 = vmul.f32 %v1042, %v1114
  %v1187 = vmul.f32 %v1043, %v1115
  %v1188 = vmul.f32 %v1044, %v1116
  %v1189 = vmul.f32 %v1117, 0.044715
  %v1190 = vmul.f32 %v1118, 0.044715
  %v1191 = vmul.f32 %v1119, 0.044715
  %v1192 = vmul.f32 %v1120, 0.044715
  %v1193 = vmul.f32 %v1121, 0.044715
  %v1194 = vmul.f32 %v1122, 0.044715
  %v1195 = vmul.f32 %v1123, 0.044715
  %v1196 = vmul.f32 %v1124, 0.044715
  %v1197 = vmul.f32 %v1125, 0.044715
  %v1198 = vmul.f32 %v1126, 0.044715
  %v1199 = vmul.f32 %v1127, 0.044715
  %v1200 = vmul.f32 %v1128, 0.044715
  %v1201 = vmul.f32 %v1129, 0.044715
  %v1202 = vmul.f32 %v1130, 0.044715
  %v1203 = vmul.f32 %v1131, 0.044715
  %v1204 = vmul.f32 %v1132, 0.044715
  %v1205 = vmul.f32 %v1133, 0.044715
  %v1206 = vmul.f32 %v1134, 0.044715
  %v1207 = vmul.f32 %v1135, 0.044715
  %v1208 = vmul.f32 %v1136, 0.044715
  %v1209 = vmul.f32 %v1137, 0.044715
  %v1210 = vmul.f32 %v1138, 0.044715
  %v1211 = vmul.f32 %v1139, 0.044715
  %v1212 = vmul.f32 %v1140, 0.044715
  %v1213 = vmul.f32 %v1141, 0.044715
  %v1214 = vmul.f32 %v1142, 0.044715
  %v1215 = vmul.f32 %v1143, 0.044715
  %v1216 = vmul.f32 %v1144, 0.044715
  %v1217 = vmul.f32 %v1145, 0.044715
  %v1218 = vmul.f32 %v1146, 0.044715
  %v1219 = vmul.f32 %v1147, 0.044715
  %v1220 = vmul.f32 %v1148, 0.044715
  %v1221 = vmul.f32 %v1149, 0.044715
  %v1222 = vmul.f32 %v1150, 0.044715
  %v1223 = vmul.f32 %v1151, 0.044715
  %v1224 = vmul.f32 %v1152, 0.044715
  %v1225 = vmul.f32 %v1153, 0.044715
  %v1226 = vmul.f32 %v1154, 0.044715
  %v1227 = vmul.f32 %v1155, 0.044715
  %v1228 = vmul.f32 %v1156, 0.044715
  %v1229 = vmul.f32 %v1157, 0.044715
  %v1230 = vmul.f32 %v1158, 0.044715
  %v1231 = vmul.f32 %v1159, 0.044715
  %v1232 = vmul.f32 %v1160, 0.044715
  %v1233 = vmul.f32 %v1161, 0.044715
  %v1234 = vmul.f32 %v1162, 0.044715
  %v1235 = vmul.f32 %v1163, 0.044715
  %v1236 = vmul.f32 %v1164, 0.044715
  %v1237 = vmul.f32 %v1165, 0.044715
  %v1238 = vmul.f32 %v1166, 0.044715
  %v1239 = vmul.f32 %v1167, 0.044715
  %v1240 = vmul.f32 %v1168, 0.044715
  %v1241 = vmul.f32 %v1169, 0.044715
  %v1242 = vmul.f32 %v1170, 0.044715
  %v1243 = vmul.f32 %v1171, 0.044715
  %v1244 = vmul.f32 %v1172, 0.044715
  %v1245 = vmul.f32 %v1173, 0.044715
  %v1246 = vmul.f32 %v1174, 0.044715
  %v1247 = vmul.f32 %v1175, 0.044715
  %v1248 = vmul.f32 %v1176, 0.044715
  %v1249 = vmul.f32 %v1177, 0.044715
  %v1250 = vmul.f32 %v1178, 0.044715
  %v1251 = vmul.f32 %v1179, 0.044715
  %v1252 = vmul.f32 %v1180, 0.044715
  %v1253 = vmul.f32 %v1181, 0.044715
  %v1254 = vmul.f32 %v1182, 0.044715
  %v1255 = vmul.f32 %v1183, 0.044715
  %v1256 = vmul.f32 %v1184, 0.044715
  %v1257 = vmul.f32 %v1185, 0.044715
  %v1258 = vmul.f32 %v1186, 0.044715
  %v1259 = vmul.f32 %v1187, 0.044715
  %v1260 = vmul.f32 %v1188, 0.044715
  %v1261 = vadd.f32 %v973, %v1189
  %v1262 = vadd.f32 %v974, %v1190
  %v1263 = vadd.f32 %v975, %v1191
  %v1264 = vadd.f32 %v976, %v1192
  %v1265 = vadd.f32 %v977, %v1193
  %v1266 = vadd.f32 %v978, %v1194
  %v1267 = vadd.f32 %v979, %v1195
  %v1268 = vadd.f32 %v980, %v1196
  %v1269 = vadd.f32 %v981, %v1197
  %v1270 = vadd.f32 %v982, %v1198
  %v1271 = vadd.f32 %v983, %v1199
  %v1272 = vadd.f32 %v984, %v1200
  %v1273 = vadd.f32 %v985, %v1201
  %v1274 = vadd.f32 %v986, %v1202
  %v1275 = vadd.f32 %v987, %v1203
  %v1276 = vadd.f32 %v988, %v1204
  %v1277 = vadd.f32 %v989, %v1205
  %v1278 = vadd.f32 %v990, %v1206
  %v1279 = vadd.f32 %v991, %v1207
  %v1280 = vadd.f32 %v992, %v1208
  %v1281 = vadd.f32 %v993, %v1209
  %v1282 = vadd.f32 %v994, %v1210
  %v1283 = vadd.f32 %v995, %v1211
  %v1284 = vadd.f32 %v996, %v1212
  %v1285 = vadd.f32 %v997, %v1213
  %v1286 = vadd.f32 %v998, %v1214
  %v1287 = vadd.f32 %v999, %v1215
  %v1288 = vadd.f32 %v1000, %v1216
  %v1289 = vadd.f32 %v1001, %v1217
  %v1290 = vadd.f32 %v1002, %v1218
  %v1291 = vadd.f32 %v1003, %v1219
  %v1292 = vadd.f32 %v1004, %v1220
  %v1293 = vadd.f32 %v1005, %v1221
  %v1294 = vadd.f32 %v1006, %v1222
  %v1295 = vadd.f32 %v1007, %v1223
  %v1296 = vadd.f32 %v1008, %v1224
  %v1297 = vadd.f32 %v1009, %v1225
  %v1298 = vadd.f32 %v1010, %v1226
  %v1299 = vadd.f32 %v1011, %v1227
  %v1300 = vadd.f32 %v1012, %v1228
  %v1301 = vadd.f32 %v1013, %v1229
  %v1302 = vadd.f32 %v1014, %v1230
  %v1303 = vadd.f32 %v1015, %v1231
  %v1304 = vadd.f32 %v1016, %v1232
  %v1305 = vadd.f32 %v1017, %v1233
  %v1306 = vadd.f32 %v1018, %v1234
  %v1307 = vadd.f32 %v1019, %v1235
  %v1308 = vadd.f32 %v1020, %v1236
  %v1309 = vadd.f32 %v1021, %v1237
  %v1310 = vadd.f32 %v1022, %v1238
  %v1311 = vadd.f32 %v1023, %v1239
  %v1312 = vadd.f32 %v1024, %v1240
  %v1313 = vadd.f32 %v1025, %v1241
  %v1314 = vadd.f32 %v1026, %v1242
  %v1315 = vadd.f32 %v1027, %v1243
  %v1316 = vadd.f32 %v1028, %v1244
  %v1317 = vadd.f32 %v1029, %v1245
  %v1318 = vadd.f32 %v1030, %v1246
  %v1319 = vadd.f32 %v1031, %v1247
  %v1320 = vadd.f32 %v1032, %v1248
  %v1321 = vadd.f32 %v1033, %v1249
  %v1322 = vadd.f32 %v1034, %v1250
  %v1323 = vadd.f32 %v1035, %v1251
  %v1324 = vadd.f32 %v1036, %v1252
  %v1325 = vadd.f32 %v1037, %v1253
  %v1326 = vadd.f32 %v1038, %v1254
  %v1327 = vadd.f32 %v1039, %v1255
  %v1328 = vadd.f32 %v1040, %v1256
  %v1329 = vadd.f32 %v1041, %v1257
  %v1330 = vadd.f32 %v1042, %v1258
  %v1331 = vadd.f32 %v1043, %v1259
  %v1332 = vadd.f32 %v1044, %v1260
  %v1333 = vmul.f32 %v1261, 0.7978846
  %v1334 = vmul.f32 %v1262, 0.7978846
  %v1335 = vmul.f32 %v1263, 0.7978846
  %v1336 = vmul.f32 %v1264, 0.7978846
  %v1337 = vmul.f32 %v1265, 0.7978846
  %v1338 = vmul.f32 %v1266, 0.7978846
  %v1339 = vmul.f32 %v1267, 0.7978846
  %v1340 = vmul.f32 %v1268, 0.7978846
  %v1341 = vmul.f32 %v1269, 0.7978846
  %v1342 = vmul.f32 %v1270, 0.7978846
  %v1343 = vmul.f32 %v1271, 0.7978846
  %v1344 = vmul.f32 %v1272, 0.7978846
  %v1345 = vmul.f32 %v1273, 0.7978846
  %v1346 = vmul.f32 %v1274, 0.7978846
  %v1347 = vmul.f32 %v1275, 0.7978846
  %v1348 = vmul.f32 %v1276, 0.7978846
  %v1349 = vmul.f32 %v1277, 0.7978846
  %v1350 = vmul.f32 %v1278, 0.7978846
  %v1351 = vmul.f32 %v1279, 0.7978846
  %v1352 = vmul.f32 %v1280, 0.7978846
  %v1353 = vmul.f32 %v1281, 0.7978846
  %v1354 = vmul.f32 %v1282, 0.7978846
  %v1355 = vmul.f32 %v1283, 0.7978846
  %v1356 = vmul.f32 %v1284, 0.7978846
  %v1357 = vmul.f32 %v1285, 0.7978846
  %v1358 = vmul.f32 %v1286, 0.7978846
  %v1359 = vmul.f32 %v1287, 0.7978846
  %v1360 = vmul.f32 %v1288, 0.7978846
  %v1361 = vmul.f32 %v1289, 0.7978846
  %v1362 = vmul.f32 %v1290, 0.7978846
  %v1363 = vmul.f32 %v1291, 0.7978846
  %v1364 = vmul.f32 %v1292, 0.7978846
  %v1365 = vmul.f32 %v1293, 0.7978846
  %v1366 = vmul.f32 %v1294, 0.7978846
  %v1367 = vmul.f32 %v1295, 0.7978846
  %v1368 = vmul.f32 %v1296, 0.7978846
  %v1369 = vmul.f32 %v1297, 0.7978846
  %v1370 = vmul.f32 %v1298, 0.7978846
  %v1371 = vmul.f32 %v1299, 0.7978846
  %v1372 = vmul.f32 %v1300, 0.7978846
  %v1373 = vmul.f32 %v1301, 0.7978846
  %v1374 = vmul.f32 %v1302, 0.7978846
  %v1375 = vmul.f32 %v1303, 0.7978846
  %v1376 = vmul.f32 %v1304, 0.7978846
  %v1377 = vmul.f32 %v1305, 0.7978846
  %v1378 = vmul.f32 %v1306, 0.7978846
  %v1379 = vmul.f32 %v1307, 0.7978846
  %v1380 = vmul.f32 %v1308, 0.7978846
  %v1381 = vmul.f32 %v1309, 0.7978846
  %v1382 = vmul.f32 %v1310, 0.7978846
  %v1383 = vmul.f32 %v1311, 0.7978846
  %v1384 = vmul.f32 %v1312, 0.7978846
  %v1385 = vmul.f32 %v1313, 0.7978846
  %v1386 = vmul.f32 %v1314, 0.7978846
  %v1387 = vmul.f32 %v1315, 0.7978846
  %v1388 = vmul.f32 %v1316, 0.7978846
  %v1389 = vmul.f32 %v1317, 0.7978846
  %v1390 = vmul.f32 %v1318, 0.7978846
  %v1391 = vmul.f32 %v1319, 0.7978846
  %v1392 = vmul.f32 %v1320, 0.7978846
  %v1393 = vmul.f32 %v1321, 0.7978846
  %v1394 = vmul.f32 %v1322, 0.7978846
  %v1395 = vmul.f32 %v1323, 0.7978846
  %v1396 = vmul.f32 %v1324, 0.7978846
  %v1397 = vmul.f32 %v1325, 0.7978846
  %v1398 = vmul.f32 %v1326, 0.7978846
  %v1399 = vmul.f32 %v1327, 0.7978846
  %v1400 = vmul.f32 %v1328, 0.7978846
  %v1401 = vmul.f32 %v1329, 0.7978846
  %v1402 = vmul.f32 %v1330, 0.7978846
  %v1403 = vmul.f32 %v1331, 0.7978846
  %v1404 = vmul.f32 %v1332, 0.7978846
  %v1405 = vtanh.pop %v1333
  %v1406 = vtanh.pop %v1334
  %v1407 = vtanh.pop %v1335
  %v1408 = vtanh.pop %v1336
  %v1409 = vtanh.pop %v1337
  %v1410 = vtanh.pop %v1338
  %v1411 = vtanh.pop %v1339
  %v1412 = vtanh.pop %v1340
  %v1413 = vtanh.pop %v1341
  %v1414 = vtanh.pop %v1342
  %v1415 = vtanh.pop %v1343
  %v1416 = vtanh.pop %v1344
  %v1417 = vtanh.pop %v1345
  %v1418 = vtanh.pop %v1346
  %v1419 = vtanh.pop %v1347
  %v1420 = vtanh.pop %v1348
  %v1421 = vtanh.pop %v1349
  %v1422 = vtanh.pop %v1350
  %v1423 = vtanh.pop %v1351
  %v1424 = vtanh.pop %v1352
  %v1425 = vtanh.pop %v1353
  %v1426 = vtanh.pop %v1354
  %v1427 = vtanh.pop %v1355
  %v1428 = vtanh.pop %v1356
  %v1429 = vtanh.pop %v1357
  %v1430 = vtanh.pop %v1358
  %v1431 = vtanh.pop %v1359
  %v1432 = vtanh.pop %v1360
  %v1433 = vtanh.pop %v1361
  %v1434 = vtanh.pop %v1362
  %v1435 = vtanh.pop %v1363
  %v1436 = vtanh.pop %v1364
  %v1437 = vtanh.pop %v1365
  %v1438 = vtanh.pop %v1366
  %v1439 = vtanh.pop %v1367
  %v1440 = vtanh.pop %v1368
  %v1441 = vtanh.pop %v1369
  %v1442 = vtanh.pop %v1370
  %v1443 = vtanh.pop %v1371
  %v1444 = vtanh.pop %v1372
  %v1445 = vtanh.pop %v1373
  %v1446 = vtanh.pop %v1374
  %v1447 = vtanh.pop %v1375
  %v1448 = vtanh.pop %v1376
  %v1449 = vtanh.pop %v1377
  %v1450 = vtanh.pop %v1378
  %v1451 = vtanh.pop %v1379
  %v1452 = vtanh.pop %v1380
  %v1453 = vtanh.pop %v1381
  %v1454 = vtanh.pop %v1382
  %v1455 = vtanh.pop %v1383
  %v1456 = vtanh.pop %v1384
  %v1457 = vtanh.pop %v1385
  %v1458 = vtanh.pop %v1386
  %v1459 = vtanh.pop %v1387
  %v1460 = vtanh.pop %v1388
  %v1461 = vtanh.pop %v1389
  %v1462 = vtanh.pop %v1390
  %v1463 = vtanh.pop %v1391
  %v1464 = vtanh.pop %v1392
  %v1465 = vtanh.pop %v1393
  %v1466 = vtanh.pop %v1394
  %v1467 = vtanh.pop %v1395
  %v1468 = vtanh.pop %v1396
  %v1469 = vtanh.pop %v1397
  %v1470 = vtanh.pop %v1398
  %v1471 = vtanh.pop %v1399
  %v1472 = vtanh.pop %v1400
  %v1473 = vtanh.pop %v1401
  %v1474 = vtanh.pop %v1402
  %v1475 = vtanh.pop %v1403
  %v1476 = vtanh.pop %v1404
  %v1477 = vadd.f32 %v1405, 1.0
  %v1478 = vadd.f32 %v1406, 1.0
  %v1479 = vadd.f32 %v1407, 1.0
  %v1480 = vadd.f32 %v1408, 1.0
  %v1481 = vadd.f32 %v1409, 1.0
  %v1482 = vadd.f32 %v1410, 1.0
  %v1483 = vadd.f32 %v1411, 1.0
  %v1484 = vadd.f32 %v1412, 1.0
  %v1485 = vadd.f32 %v1413, 1.0
  %v1486 = vadd.f32 %v1414, 1.0
  %v1487 = vadd.f32 %v1415, 1.0
  %v1488 = vadd.f32 %v1416, 1.0
  %v1489 = vadd.f32 %v1417, 1.0
  %v1490 = vadd.f32 %v1418, 1.0
  %v1491 = vadd.f32 %v1419, 1.0
  %v1492 = vadd.f32 %v1420, 1.0
  %v1493 = vadd.f32 %v1421, 1.0
  %v1494 = vadd.f32 %v1422, 1.0
  %v1495 = vadd.f32 %v1423, 1.0
  %v1496 = vadd.f32 %v1424, 1.0
  %v1497 = vadd.f32 %v1425, 1.0
  %v1498 = vadd.f32 %v1426, 1.0
  %v1499 = vadd.f32 %v1427, 1.0
  %v1500 = vadd.f32 %v1428, 1.0
  %v1501 = vadd.f32 %v1429, 1.0
  %v1502 = vadd.f32 %v1430, 1.0
  %v1503 = vadd.f32 %v1431, 1.0
  %v1504 = vadd.f32 %v1432, 1.0
  %v1505 = vadd.f32 %v1433, 1.0
  %v1506 = vadd.f32 %v1434, 1.0
  %v1507 = vadd.f32 %v1435, 1.0
  %v1508 = vadd.f32 %v1436, 1.0
  %v1509 = vadd.f32 %v1437, 1.0
  %v1510 = vadd.f32 %v1438, 1.0
  %v1511 = vadd.f32 %v1439, 1.0
  %v1512 = vadd.f32 %v1440, 1.0
  %v1513 = vadd.f32 %v1441, 1.0
  %v1514 = vadd.f32 %v1442, 1.0
  %v1515 = vadd.f32 %v1443, 1.0
  %v1516 = vadd.f32 %v1444, 1.0
  %v1517 = vadd.f32 %v1445, 1.0
  %v1518 = vadd.f32 %v1446, 1.0
  %v1519 = vadd.f32 %v1447, 1.0
  %v1520 = vadd.f32 %v1448, 1.0
  %v1521 = vadd.f32 %v1449, 1.0
  %v1522 = vadd.f32 %v1450, 1.0
  %v1523 = vadd.f32 %v1451, 1.0
  %v1524 = vadd.f32 %v1452, 1.0
  %v1525 = vadd.f32 %v1453, 1.0
  %v1526 = vadd.f32 %v1454, 1.0
  %v1527 = vadd.f32 %v1455, 1.0
  %v1528 = vadd.f32 %v1456, 1.0
  %v1529 = vadd.f32 %v1457, 1.0
  %v1530 = vadd.f32 %v1458, 1.0
  %v1531 = vadd.f32 %v1459, 1.0
  %v1532 = vadd.f32 %v1460, 1.0
  %v1533 = vadd.f32 %v1461, 1.0
  %v1534 = vadd.f32 %v1462, 1.0
  %v1535 = vadd.f32 %v1463, 1.0
  %v1536 = vadd.f32 %v1464, 1.0
  %v1537 = vadd.f32 %v1465, 1.0
  %v1538 = vadd.f32 %v1466, 1.0
  %v1539 = vadd.f32 %v1467, 1.0
  %v1540 = vadd.f32 %v1468, 1.0
  %v1541 = vadd.f32 %v1469, 1.0
  %v1542 = vadd.f32 %v1470, 1.0
  %v1543 = vadd.f32 %v1471, 1.0
  %v1544 = vadd.f32 %v1472, 1.0
  %v1545 = vadd.f32 %v1473, 1.0
  %v1546 = vadd.f32 %v1474, 1.0
  %v1547 = vadd.f32 %v1475, 1.0
  %v1548 = vadd.f32 %v1476, 1.0
  %v1549 = vmul.f32 %v1477, 0.5
  %v1550 = vmul.f32 %v1478, 0.5
  %v1551 = vmul.f32 %v1479, 0.5
  %v1552 = vmul.f32 %v1480, 0.5
  %v1553 = vmul.f32 %v1481, 0.5
  %v1554 = vmul.f32 %v1482, 0.5
  %v1555 = vmul.f32 %v1483, 0.5
  %v1556 = vmul.f32 %v1484, 0.5
  %v1557 = vmul.f32 %v1485, 0.5
  %v1558 = vmul.f32 %v1486, 0.5
  %v1559 = vmul.f32 %v1487, 0.5
  %v1560 = vmul.f32 %v1488, 0.5
  %v1561 = vmul.f32 %v1489, 0.5
  %v1562 = vmul.f32 %v1490, 0.5
  %v1563 = vmul.f32 %v1491, 0.5
  %v1564 = vmul.f32 %v1492, 0.5
  %v1565 = vmul.f32 %v1493, 0.5
  %v1566 = vmul.f32 %v1494, 0.5
  %v1567 = vmul.f32 %v1495, 0.5
  %v1568 = vmul.f32 %v1496, 0.5
  %v1569 = vmul.f32 %v1497, 0.5
  %v1570 = vmul.f32 %v1498, 0.5
  %v1571 = vmul.f32 %v1499, 0.5
  %v1572 = vmul.f32 %v1500, 0.5
  %v1573 = vmul.f32 %v1501, 0.5
  %v1574 = vmul.f32 %v1502, 0.5
  %v1575 = vmul.f32 %v1503, 0.5
  %v1576 = vmul.f32 %v1504, 0.5
  %v1577 = vmul.f32 %v1505, 0.5
  %v1578 = vmul.f32 %v1506, 0.5
  %v1579 = vmul.f32 %v1507, 0.5
  %v1580 = vmul.f32 %v1508, 0.5
  %v1581 = vmul.f32 %v1509, 0.5
  %v1582 = vmul.f32 %v1510, 0.5
  %v1583 = vmul.f32 %v1511, 0.5
  %v1584 = vmul.f32 %v1512, 0.5
  %v1585 = vmul.f32 %v1513, 0.5
  %v1586 = vmul.f32 %v1514, 0.5
  %v1587 = vmul.f32 %v1515, 0.5
  %v1588 = vmul.f32 %v1516, 0.5
  %v1589 = vmul.f32 %v1517, 0.5
  %v1590 = vmul.f32 %v1518, 0.5
  %v1591 = vmul.f32 %v1519, 0.5
  %v1592 = vmul.f32 %v1520, 0.5
  %v1593 = vmul.f32 %v1521, 0.5
  %v1594 = vmul.f32 %v1522, 0.5
  %v1595 = vmul.f32 %v1523, 0.5
  %v1596 = vmul.f32 %v1524, 0.5
  %v1597 = vmul.f32 %v1525, 0.5
  %v1598 = vmul.f32 %v1526, 0.5
  %v1599 = vmul.f32 %v1527, 0.5
  %v1600 = vmul.f32 %v1528, 0.5
  %v1601 = vmul.f32 %v1529, 0.5
  %v1602 = vmul.f32 %v1530, 0.5
  %v1603 = vmul.f32 %v1531, 0.5
  %v1604 = vmul.f32 %v1532, 0.5
  %v1605 = vmul.f32 %v1533, 0.5
  %v1606 = vmul.f32 %v1534, 0.5
  %v1607 = vmul.f32 %v1535, 0.5
  %v1608 = vmul.f32 %v1536, 0.5
  %v1609 = vmul.f32 %v1537, 0.5
  %v1610 = vmul.f32 %v1538, 0.5
  %v1611 = vmul.f32 %v1539, 0.5
  %v1612 = vmul.f32 %v1540, 0.5
  %v1613 = vmul.f32 %v1541, 0.5
  %v1614 = vmul.f32 %v1542, 0.5
  %v1615 = vmul.f32 %v1543, 0.5
  %v1616 = vmul.f32 %v1544, 0.5
  %v1617 = vmul.f32 %v1545, 0.5
  %v1618 = vmul.f32 %v1546, 0.5
  %v1619 = vmul.f32 %v1547, 0.5
  %v1620 = vmul.f32 %v1548, 0.5
  %v1621 = vmul.f32 %v973, %v1549
  %v1622 = vmul.f32 %v974, %v1550
  %v1623 = vmul.f32 %v975, %v1551
  %v1624 = vmul.f32 %v976, %v1552
  %v1625 = vmul.f32 %v977, %v1553
  %v1626 = vmul.f32 %v978, %v1554
  %v1627 = vmul.f32 %v979, %v1555
  %v1628 = vmul.f32 %v980, %v1556
  %v1629 = vmul.f32 %v981, %v1557
  %v1630 = vmul.f32 %v982, %v1558
  %v1631 = vmul.f32 %v983, %v1559
  %v1632 = vmul.f32 %v984, %v1560
  %v1633 = vmul.f32 %v985, %v1561
  %v1634 = vmul.f32 %v986, %v1562
  %v1635 = vmul.f32 %v987, %v1563
  %v1636 = vmul.f32 %v988, %v1564
  %v1637 = vmul.f32 %v989, %v1565
  %v1638 = vmul.f32 %v990, %v1566
  %v1639 = vmul.f32 %v991, %v1567
  %v1640 = vmul.f32 %v992, %v1568
  %v1641 = vmul.f32 %v993, %v1569
  %v1642 = vmul.f32 %v994, %v1570
  %v1643 = vmul.f32 %v995, %v1571
  %v1644 = vmul.f32 %v996, %v1572
  %v1645 = vmul.f32 %v997, %v1573
  %v1646 = vmul.f32 %v998, %v1574
  %v1647 = vmul.f32 %v999, %v1575
  %v1648 = vmul.f32 %v1000, %v1576
  %v1649 = vmul.f32 %v1001, %v1577
  %v1650 = vmul.f32 %v1002, %v1578
  %v1651 = vmul.f32 %v1003, %v1579
  %v1652 = vmul.f32 %v1004, %v1580
  %v1653 = vmul.f32 %v1005, %v1581
  %v1654 = vmul.f32 %v1006, %v1582
  %v1655 = vmul.f32 %v1007, %v1583
  %v1656 = vmul.f32 %v1008, %v1584
  %v1657 = vmul.f32 %v1009, %v1585
  %v1658 = vmul.f32 %v1010, %v1586
  %v1659 = vmul.f32 %v1011, %v1587
  %v1660 = vmul.f32 %v1012, %v1588
  %v1661 = vmul.f32 %v1013, %v1589
  %v1662 = vmul.f32 %v1014, %v1590
  %v1663 = vmul.f32 %v1015, %v1591
  %v1664 = vmul.f32 %v1016, %v1592
  %v1665 = vmul.f32 %v1017, %v1593
  %v1666 = vmul.f32 %v1018, %v1594
  %v1667 = vmul.f32 %v1019, %v1595
  %v1668 = vmul.f32 %v1020, %v1596
  %v1669 = vmul.f32 %v1021, %v1597
  %v1670 = vmul.f32 %v1022, %v1598
  %v1671 = vmul.f32 %v1023, %v1599
  %v1672 = vmul.f32 %v1024, %v1600
  %v1673 = vmul.f32 %v1025, %v1601
  %v1674 = vmul.f32 %v1026, %v1602
  %v1675 = vmul.f32 %v1027, %v1603
  %v1676 = vmul.f32 %v1028, %v1604
  %v1677 = vmul.f32 %v1029, %v1605
  %v1678 = vmul.f32 %v1030, %v1606
  %v1679 = vmul.f32 %v1031, %v1607
  %v1680 = vmul.f32 %v1032, %v1608
  %v1681 = vmul.f32 %v1033, %v1609
  %v1682 = vmul.f32 %v1034, %v1610
  %v1683 = vmul.f32 %v1035, %v1611
  %v1684 = vmul.f32 %v1036, %v1612
  %v1685 = vmul.f32 %v1037, %v1613
  %v1686 = vmul.f32 %v1038, %v1614
  %v1687 = vmul.f32 %v1039, %v1615
  %v1688 = vmul.f32 %v1040, %v1616
  %v1689 = vmul.f32 %v1041, %v1617
  %v1690 = vmul.f32 %v1042, %v1618
  %v1691 = vmul.f32 %v1043, %v1619
  %v1692 = vmul.f32 %v1044, %v1620
  %v1693 = vpack.c.bf16 %v1622, %v1621
  %v1694 = vpack.c.bf16 %v1624, %v1623
  %v1695 = vpack.c.bf16 %v1626, %v1625
  %v1696 = vpack.c.bf16 %v1628, %v1627
  %v1697 = vpack.c.bf16 %v1630, %v1629
  %v1698 = vpack.c.bf16 %v1632, %v1631
  %v1699 = vpack.c.bf16 %v1634, %v1633
  %v1700 = vpack.c.bf16 %v1636, %v1635
  %v1701 = vpack.c.bf16 %v1638, %v1637
  %v1702 = vpack.c.bf16 %v1640, %v1639
  %v1703 = vpack.c.bf16 %v1642, %v1641
  %v1704 = vpack.c.bf16 %v1644, %v1643
  %v1705 = vpack.c.bf16 %v1646, %v1645
  %v1706 = vpack.c.bf16 %v1648, %v1647
  %v1707 = vpack.c.bf16 %v1650, %v1649
  %v1708 = vpack.c.bf16 %v1652, %v1651
  %v1709 = vpack.c.bf16 %v1654, %v1653
  %v1710 = vpack.c.bf16 %v1656, %v1655
  %v1711 = vpack.c.bf16 %v1658, %v1657
  %v1712 = vpack.c.bf16 %v1660, %v1659
  %v1713 = vpack.c.bf16 %v1662, %v1661
  %v1714 = vpack.c.bf16 %v1664, %v1663
  %v1715 = vpack.c.bf16 %v1666, %v1665
  %v1716 = vpack.c.bf16 %v1668, %v1667
  %v1717 = vpack.c.bf16 %v1670, %v1669
  %v1718 = vpack.c.bf16 %v1672, %v1671
  %v1719 = vpack.c.bf16 %v1674, %v1673
  %v1720 = vpack.c.bf16 %v1676, %v1675
  %v1721 = vpack.c.bf16 %v1678, %v1677
  %v1722 = vpack.c.bf16 %v1680, %v1679
  %v1723 = vpack.c.bf16 %v1682, %v1681
  %v1724 = vpack.c.bf16 %v1684, %v1683
  %v1725 = vpack.c.bf16 %v1686, %v1685
  %v1726 = vpack.c.bf16 %v1688, %v1687
  %v1727 = vpack.c.bf16 %v1690, %v1689
  %v1728 = vpack.c.bf16 %v1692, %v1691
  %v1729 = vld [vmem:[%s3] sm:$0xf]
  %v1730 = vld [vmem:[%s3 + $0x4] sm:$0xf]
  %v1731 = vld [vmem:[%s3 + $0x8] sm:$0xf]
  %v1732 = vld [vmem:[%s3 + $0xc] sm:$0xf]
  %v1733 = vld [vmem:[%s4] sm:$0x1]
  %v1735 = vlaneseq
  %v1736 = vshrl.u32 %v1735, 7
  %v1737 = vsub.s32 0, %v1736
  %v1738 = vrot.slane %v1733, %v1737
  %v1744 = vunpack.c.l.b16 %v1729
  %v1745 = vunpack.c.l.b16 %v1730
  %v1746 = vunpack.c.l.b16 %v1731
  %v1747 = vunpack.c.l.b16 %v1732
  %v1748 = vpack.c.b16 %v1745, %v1744
  %v1749 = vpack.c.b16 %v1747, %v1746
  %vm1752 = vcmask 261120
  %v1754 = vsel %vm1752, %v1693, 0
  %v1757 = vsel %vm1752, %v1694, 0
  %v1760 = vsel %vm1752, %v1695, 0
  %v1763 = vsel %vm1752, %v1696, 0
  %v1766 = vsel %vm1752, %v1697, 0
  %v1769 = vsel %vm1752, %v1698, 0
  %v1772 = vsel %vm1752, %v1699, 0
  %v1775 = vsel %vm1752, %v1700, 0
  %v1778 = vsel %vm1752, %v1701, 0
  %v1781 = vsel %vm1752, %v1702, 0
  %v1784 = vsel %vm1752, %v1703, 0
  %v1787 = vsel %vm1752, %v1704, 0
  %v1790 = vsel %vm1752, %v1705, 0
  %v1793 = vsel %vm1752, %v1706, 0
  %v1796 = vsel %vm1752, %v1707, 0
  %v1799 = vsel %vm1752, %v1708, 0
  %v1802 = vsel %vm1752, %v1709, 0
  %v1805 = vsel %vm1752, %v1710, 0
  %v1808 = vsel %vm1752, %v1711, 0
  %v1811 = vsel %vm1752, %v1712, 0
  %v1814 = vsel %vm1752, %v1713, 0
  %v1817 = vsel %vm1752, %v1714, 0
  %v1820 = vsel %vm1752, %v1715, 0
  %v1823 = vsel %vm1752, %v1716, 0
  %v1826 = vsel %vm1752, %v1717, 0
  %v1829 = vsel %vm1752, %v1718, 0
  %v1832 = vsel %vm1752, %v1719, 0
  %v1835 = vsel %vm1752, %v1720, 0
  %v1838 = vsel %vm1752, %v1721, 0
  %v1841 = vsel %vm1752, %v1722, 0
  %v1844 = vsel %vm1752, %v1723, 0
  %v1847 = vsel %vm1752, %v1724, 0
  %v1850 = vsel %vm1752, %v1725, 0
  %v1853 = vsel %vm1752, %v1726, 0
  %v1856 = vsel %vm1752, %v1727, 0
  %v1859 = vsel %vm1752, %v1728, 0
  %1861 = vmatprep.subr.bf16.mxu0 0
  %1862 = vmatpush1.bf16.msra.mxu0 %v1748
  %1863 = vmatprep.subr.bf16.mxu0 0
  %1864 = vmatpush1.bf16.msra.mxu0 %v1749
  %1865 = vmatprep.subr.bf16.mxu0 0
  %1866 = vmatpush1.bf16.msra.mxu0 0
  %1867 = vmatprep.subr.bf16.mxu0 0
  %1868 = vmatpush1.bf16.msra.mxu0 0
  %1869 = vmatprep.subr.bf16.mxu0 0
  %1870 = vmatpush1.bf16.msra.mxu0 0
  %1871 = vmatprep.subr.bf16.mxu0 0
  %1872 = vmatpush1.bf16.msra.mxu0 0
  %1873 = vmatprep.subr.bf16.mxu0 0
  %1874 = vmatpush1.bf16.msra.mxu0 0
  %1875 = vmatprep.subr.bf16.mxu0 0
  %1876 = vmatpush1.bf16.msra.mxu0 0
  %1877 = vmatprep.subr.bf16.mxu0 0
  %1878 = vmatpush1.bf16.msra.mxu0 0
  %1879 = vmatprep.subr.bf16.mxu0 0
  %1880 = vmatpush1.bf16.msra.mxu0 0
  %1881 = vmatprep.subr.bf16.mxu0 0
  %1882 = vmatpush1.bf16.msra.mxu0 0
  %1883 = vmatprep.subr.bf16.mxu0 0
  %1884 = vmatpush1.bf16.msra.mxu0 0
  %1885 = vmatprep.subr.bf16.mxu0 0
  %1886 = vmatpush1.bf16.msra.mxu0 0
  %1887 = vmatprep.subr.bf16.mxu0 0
  %1888 = vmatpush1.bf16.msra.mxu0 0
  %1889 = vmatprep.subr.bf16.mxu0 0
  %1890 = vmatpush1.bf16.msra.mxu0 0
  %1891 = vmatprep.subr.bf16.mxu0 0
  %1892 = vmatpush1.bf16.msra.mxu0 0
  %1893 = vmatprep.mubr.bf16.mxu0 0
  %1894 = vmatmul.mubr.bf16.gmra.mrb[0].mxu0 %v1754
  %v1895 = vpop.f32.mrb[0].mxu0
  %v1896 = vadd.f32 %v1738, %v1895
  %v1897 = vpop.f32.mrb[0].mxu0
  %v1898 = vpop.f32.mrb[0].mxu0
  %v1899 = vadd.f32 %v1738, %v1898
  %v1900 = vpop.f32.mrb[0].mxu0
  %1901 = vmatprep.mubr.bf16.mxu0 0
  %1902 = vmatmul.mubr.bf16.gmra.mrb[0].mxu0 %v1757
  %v1903 = vpop.f32.mrb[0].mxu0
  %v1904 = vadd.f32 %v1738, %v1903
  %v1905 = vpop.f32.mrb[0].mxu0
  %v1906 = vpop.f32.mrb[0].mxu0
  %v1907 = vadd.f32 %v1738, %v1906
  %v1908 = vpop.f32.mrb[0].mxu0
  %1909 = vmatprep.mubr.bf16.mxu0 0
  %1910 = vmatmul.mubr.bf16.gmra.mrb[0].mxu0 %v1760
  %v1911 = vpop.f32.mrb[0].mxu0
  %v1912 = vadd.f32 %v1738, %v1911
  %v1913 = vpop.f32.mrb[0].mxu0
  %v1914 = vpop.f32.mrb[0].mxu0
  %v1915 = vadd.f32 %v1738, %v1914
  %v1916 = vpop.f32.mrb[0].mxu0
  %1917 = vmatprep.mubr.bf16.mxu0 0
  %1918 = vmatmul.mubr.bf16.gmra.mrb[0].mxu0 %v1763
  %v1919 = vpop.f32.mrb[0].mxu0
  %v1920 = vadd.f32 %v1738, %v1919
  %v1921 = vpop.f32.mrb[0].mxu0
  %v1922 = vpop.f32.mrb[0].mxu0
  %v1923 = vadd.f32 %v1738, %v1922
  %v1924 = vpop.f32.mrb[0].mxu0
  %1925 = vmatprep.mubr.bf16.mxu0 0
  %1926 = vmatmul.mubr.bf16.gmra.mrb[0].mxu0 %v1766
  %v1927 = vpop.f32.mrb[0].mxu0
  %v1928 = vadd.f32 %v1738, %v1927
  %v1929 = vpop.f32.mrb[0].mxu0
  %v1930 = vpop.f32.mrb[0].mxu0
  %v1931 = vadd.f32 %v1738, %v1930
  %v1932 = vpop.f32.mrb[0].mxu0
  %1933 = vmatprep.mubr.bf16.mxu0 0
  %1934 = vmatmul.mubr.bf16.gmra.mrb[0].mxu0 %v1769
  %v1935 = vpop.f32.mrb[0].mxu0
  %v1936 = vadd.f32 %v1738, %v1935
  %v1937 = vpop.f32.mrb[0].mxu0
  %v1938 = vpop.f32.mrb[0].mxu0
  %v1939 = vadd.f32 %v1738, %v1938
  %v1940 = vpop.f32.mrb[0].mxu0
  %1941 = vmatprep.mubr.bf16.mxu0 0
  %1942 = vmatmul.mubr.bf16.gmra.mrb[0].mxu0 %v1772
  %v1943 = vpop.f32.mrb[0].mxu0
  %v1944 = vadd.f32 %v1738, %v1943
  %v1945 = vpop.f32.mrb[0].mxu0
  %v1946 = vpop.f32.mrb[0].mxu0
  %v1947 = vadd.f32 %v1738, %v1946
  %v1948 = vpop.f32.mrb[0].mxu0
  %1949 = vmatprep.mubr.bf16.mxu0 0
  %1950 = vmatmul.mubr.bf16.gmra.mrb[0].mxu0 %v1775
  %v1951 = vpop.f32.mrb[0].mxu0
  %v1952 = vadd.f32 %v1738, %v1951
  %v1953 = vpop.f32.mrb[0].mxu0
  %v1954 = vpop.f32.mrb[0].mxu0
  %v1955 = vadd.f32 %v1738, %v1954
  %v1956 = vpop.f32.mrb[0].mxu0
  %1957 = vmatprep.mubr.bf16.mxu0 0
  %1958 = vmatmul.mubr.bf16.gmra.mrb[0].mxu0 %v1778
  %v1959 = vpop.f32.mrb[0].mxu0
  %v1960 = vadd.f32 %v1738, %v1959
  %v1961 = vpop.f32.mrb[0].mxu0
  %v1962 = vpop.f32.mrb[0].mxu0
  %v1963 = vadd.f32 %v1738, %v1962
  %v1964 = vpop.f32.mrb[0].mxu0
  %1965 = vmatprep.mubr.bf16.mxu0 0
  %1966 = vmatmul.mubr.bf16.gmra.mrb[0].mxu0 %v1781
  %v1967 = vpop.f32.mrb[0].mxu0
  %v1968 = vadd.f32 %v1738, %v1967
  %v1969 = vpop.f32.mrb[0].mxu0
  %v1970 = vpop.f32.mrb[0].mxu0
  %v1971 = vadd.f32 %v1738, %v1970
  %v1972 = vpop.f32.mrb[0].mxu0
  %1973 = vmatprep.mubr.bf16.mxu0 0
  %1974 = vmatmul.mubr.bf16.gmra.mrb[0].mxu0 %v1784
  %v1975 = vpop.f32.mrb[0].mxu0
  %v1976 = vadd.f32 %v1738, %v1975
  %v1977 = vpop.f32.mrb[0].mxu0
  %v1978 = vpop.f32.mrb[0].mxu0
  %v1979 = vadd.f32 %v1738, %v1978
  %v1980 = vpop.f32.mrb[0].mxu0
  %1981 = vmatprep.mubr.bf16.mxu0 0
  %1982 = vmatmul.mubr.bf16.gmra.mrb[0].mxu0 %v1787
  %v1983 = vpop.f32.mrb[0].mxu0
  %v1984 = vadd.f32 %v1738, %v1983
  %v1985 = vpop.f32.mrb[0].mxu0
  %v1986 = vpop.f32.mrb[0].mxu0
  %v1987 = vadd.f32 %v1738, %v1986
  %v1988 = vpop.f32.mrb[0].mxu0
  %1989 = vmatprep.mubr.bf16.mxu0 0
  %1990 = vmatmul.mubr.bf16.gmra.mrb[0].mxu0 %v1790
  %v1991 = vpop.f32.mrb[0].mxu0
  %v1992 = vadd.f32 %v1738, %v1991
  %v1993 = vpop.f32.mrb[0].mxu0
  %v1994 = vpop.f32.mrb[0].mxu0
  %v1995 = vadd.f32 %v1738, %v1994
  %v1996 = vpop.f32.mrb[0].mxu0
  %1997 = vmatprep.mubr.bf16.mxu0 0
  %1998 = vmatmul.mubr.bf16.gmra.mrb[0].mxu0 %v1793
  %v1999 = vpop.f32.mrb[0].mxu0
  %v2000 = vadd.f32 %v1738, %v1999
  %v2001 = vpop.f32.mrb[0].mxu0
  %v2002 = vpop.f32.mrb[0].mxu0
  %v2003 = vadd.f32 %v1738, %v2002
  %v2004 = vpop.f32.mrb[0].mxu0
  %2005 = vmatprep.mubr.bf16.mxu0 0
  %2006 = vmatmul.mubr.bf16.gmra.mrb[0].mxu0 %v1796
  %v2007 = vpop.f32.mrb[0].mxu0
  %v2008 = vadd.f32 %v1738, %v2007
  %v2009 = vpop.f32.mrb[0].mxu0
  %v2010 = vpop.f32.mrb[0].mxu0
  %v2011 = vadd.f32 %v1738, %v2010
  %v2012 = vpop.f32.mrb[0].mxu0
  %2013 = vmatprep.mubr.bf16.mxu0 0
  %2014 = vmatmul.mubr.bf16.gmra.mrb[0].mxu0 %v1799
  %v2015 = vpop.f32.mrb[0].mxu0
  %v2016 = vadd.f32 %v1738, %v2015
  %v2017 = vpop.f32.mrb[0].mxu0
  %v2018 = vpop.f32.mrb[0].mxu0
  %v2019 = vadd.f32 %v1738, %v2018
  %v2020 = vpop.f32.mrb[0].mxu0
  %2021 = vmatprep.mubr.bf16.mxu0 0
  %2022 = vmatmul.mubr.bf16.gmra.mrb[0].mxu0 %v1802
  %v2023 = vpop.f32.mrb[0].mxu0
  %v2024 = vadd.f32 %v1738, %v2023
  %v2025 = vpop.f32.mrb[0].mxu0
  %v2026 = vpop.f32.mrb[0].mxu0
  %v2027 = vadd.f32 %v1738, %v2026
  %v2028 = vpop.f32.mrb[0].mxu0
  %2029 = vmatprep.mubr.bf16.mxu0 0
  %2030 = vmatmul.mubr.bf16.gmra.mrb[0].mxu0 %v1805
  %v2031 = vpop.f32.mrb[0].mxu0
  %v2032 = vadd.f32 %v1738, %v2031
  %v2033 = vpop.f32.mrb[0].mxu0
  %v2034 = vpop.f32.mrb[0].mxu0
  %v2035 = vadd.f32 %v1738, %v2034
  %v2036 = vpop.f32.mrb[0].mxu0
  %2037 = vmatprep.mubr.bf16.mxu0 0
  %2038 = vmatmul.mubr.bf16.gmra.mrb[0].mxu0 %v1808
  %v2039 = vpop.f32.mrb[0].mxu0
  %v2040 = vadd.f32 %v1738, %v2039
  %v2041 = vpop.f32.mrb[0].mxu0
  %v2042 = vpop.f32.mrb[0].mxu0
  %v2043 = vadd.f32 %v1738, %v2042
  %v2044 = vpop.f32.mrb[0].mxu0
  %2045 = vmatprep.mubr.bf16.mxu0 0
  %2046 = vmatmul.mubr.bf16.gmra.mrb[0].mxu0 %v1811
  %v2047 = vpop.f32.mrb[0].mxu0
  %v2048 = vadd.f32 %v1738, %v2047
  %v2049 = vpop.f32.mrb[0].mxu0
  %v2050 = vpop.f32.mrb[0].mxu0
  %v2051 = vadd.f32 %v1738, %v2050
  %v2052 = vpop.f32.mrb[0].mxu0
  %2053 = vmatprep.mubr.bf16.mxu0 0
  %2054 = vmatmul.mubr.bf16.gmra.mrb[0].mxu0 %v1814
  %v2055 = vpop.f32.mrb[0].mxu0
  %v2056 = vadd.f32 %v1738, %v2055
  %v2057 = vpop.f32.mrb[0].mxu0
  %v2058 = vpop.f32.mrb[0].mxu0
  %v2059 = vadd.f32 %v1738, %v2058
  %v2060 = vpop.f32.mrb[0].mxu0
  %2061 = vmatprep.mubr.bf16.mxu0 0
  %2062 = vmatmul.mubr.bf16.gmra.mrb[0].mxu0 %v1817
  %v2063 = vpop.f32.mrb[0].mxu0
  %v2064 = vadd.f32 %v1738, %v2063
  %v2065 = vpop.f32.mrb[0].mxu0
  %v2066 = vpop.f32.mrb[0].mxu0
  %v2067 = vadd.f32 %v1738, %v2066
  %v2068 = vpop.f32.mrb[0].mxu0
  %2069 = vmatprep.mubr.bf16.mxu0 0
  %2070 = vmatmul.mubr.bf16.gmra.mrb[0].mxu0 %v1820
  %v2071 = vpop.f32.mrb[0].mxu0
  %v2072 = vadd.f32 %v1738, %v2071
  %v2073 = vpop.f32.mrb[0].mxu0
  %v2074 = vpop.f32.mrb[0].mxu0
  %v2075 = vadd.f32 %v1738, %v2074
  %v2076 = vpop.f32.mrb[0].mxu0
  %2077 = vmatprep.mubr.bf16.mxu0 0
  %2078 = vmatmul.mubr.bf16.gmra.mrb[0].mxu0 %v1823
  %v2079 = vpop.f32.mrb[0].mxu0
  %v2080 = vadd.f32 %v1738, %v2079
  %v2081 = vpop.f32.mrb[0].mxu0
  %v2082 = vpop.f32.mrb[0].mxu0
  %v2083 = vadd.f32 %v1738, %v2082
  %v2084 = vpop.f32.mrb[0].mxu0
  %2085 = vmatprep.mubr.bf16.mxu0 0
  %2086 = vmatmul.mubr.bf16.gmra.mrb[0].mxu0 %v1826
  %v2087 = vpop.f32.mrb[0].mxu0
  %v2088 = vadd.f32 %v1738, %v2087
  %v2089 = vpop.f32.mrb[0].mxu0
  %v2090 = vpop.f32.mrb[0].mxu0
  %v2091 = vadd.f32 %v1738, %v2090
  %v2092 = vpop.f32.mrb[0].mxu0
  %2093 = vmatprep.mubr.bf16.mxu0 0
  %2094 = vmatmul.mubr.bf16.gmra.mrb[0].mxu0 %v1829
  %v2095 = vpop.f32.mrb[0].mxu0
  %v2096 = vadd.f32 %v1738, %v2095
  %v2097 = vpop.f32.mrb[0].mxu0
  %v2098 = vpop.f32.mrb[0].mxu0
  %v2099 = vadd.f32 %v1738, %v2098
  %v2100 = vpop.f32.mrb[0].mxu0
  %2101 = vmatprep.mubr.bf16.mxu0 0
  %2102 = vmatmul.mubr.bf16.gmra.mrb[0].mxu0 %v1832
  %v2103 = vpop.f32.mrb[0].mxu0
  %v2104 = vadd.f32 %v1738, %v2103
  %v2105 = vpop.f32.mrb[0].mxu0
  %v2106 = vpop.f32.mrb[0].mxu0
  %v2107 = vadd.f32 %v1738, %v2106
  %v2108 = vpop.f32.mrb[0].mxu0
  %2109 = vmatprep.mubr.bf16.mxu0 0
  %2110 = vmatmul.mubr.bf16.gmra.mrb[0].mxu0 %v1835
  %v2111 = vpop.f32.mrb[0].mxu0
  %v2112 = vadd.f32 %v1738, %v2111
  %v2113 = vpop.f32.mrb[0].mxu0
  %v2114 = vpop.f32.mrb[0].mxu0
  %v2115 = vadd.f32 %v1738, %v2114
  %v2116 = vpop.f32.mrb[0].mxu0
  %2117 = vmatprep.mubr.bf16.mxu0 0
  %2118 = vmatmul.mubr.bf16.gmra.mrb[0].mxu0 %v1838
  %v2119 = vpop.f32.mrb[0].mxu0
  %v2120 = vadd.f32 %v1738, %v2119
  %v2121 = vpop.f32.mrb[0].mxu0
  %v2122 = vpop.f32.mrb[0].mxu0
  %v2123 = vadd.f32 %v1738, %v2122
  %v2124 = vpop.f32.mrb[0].mxu0
  %2125 = vmatprep.mubr.bf16.mxu0 0
  %2126 = vmatmul.mubr.bf16.gmra.mrb[0].mxu0 %v1841
  %v2127 = vpop.f32.mrb[0].mxu0
  %v2128 = vadd.f32 %v1738, %v2127
  %v2129 = vpop.f32.mrb[0].mxu0
  %v2130 = vpop.f32.mrb[0].mxu0
  %v2131 = vadd.f32 %v1738, %v2130
  %v2132 = vpop.f32.mrb[0].mxu0
  %2133 = vmatprep.mubr.bf16.mxu0 0
  %2134 = vmatmul.mubr.bf16.gmra.mrb[0].mxu0 %v1844
  %v2135 = vpop.f32.mrb[0].mxu0
  %v2136 = vadd.f32 %v1738, %v2135
  %v2137 = vpop.f32.mrb[0].mxu0
  %v2138 = vpop.f32.mrb[0].mxu0
  %v2139 = vadd.f32 %v1738, %v2138
  %v2140 = vpop.f32.mrb[0].mxu0
  %2141 = vmatprep.mubr.bf16.mxu0 0
  %2142 = vmatmul.mubr.bf16.gmra.mrb[0].mxu0 %v1847
  %v2143 = vpop.f32.mrb[0].mxu0
  %v2144 = vadd.f32 %v1738, %v2143
  %v2145 = vpop.f32.mrb[0].mxu0
  %v2146 = vpop.f32.mrb[0].mxu0
  %v2147 = vadd.f32 %v1738, %v2146
  %v2148 = vpop.f32.mrb[0].mxu0
  %2149 = vmatprep.mubr.bf16.mxu0 0
  %2150 = vmatmul.mubr.bf16.gmra.mrb[0].mxu0 %v1850
  %v2151 = vpop.f32.mrb[0].mxu0
  %v2152 = vadd.f32 %v1738, %v2151
  %v2153 = vpop.f32.mrb[0].mxu0
  %v2154 = vpop.f32.mrb[0].mxu0
  %v2155 = vadd.f32 %v1738, %v2154
  %v2156 = vpop.f32.mrb[0].mxu0
  %2157 = vmatprep.mubr.bf16.mxu0 0
  %2158 = vmatmul.mubr.bf16.gmra.mrb[0].mxu0 %v1853
  %v2159 = vpop.f32.mrb[0].mxu0
  %v2160 = vadd.f32 %v1738, %v2159
  %v2161 = vpop.f32.mrb[0].mxu0
  %v2162 = vpop.f32.mrb[0].mxu0
  %v2163 = vadd.f32 %v1738, %v2162
  %v2164 = vpop.f32.mrb[0].mxu0
  %2165 = vmatprep.mubr.bf16.mxu0 0
  %2166 = vmatmul.mubr.bf16.gmra.mrb[0].mxu0 %v1856
  %v2167 = vpop.f32.mrb[0].mxu0
  %v2168 = vadd.f32 %v1738, %v2167
  %v2169 = vpop.f32.mrb[0].mxu0
  %v2170 = vpop.f32.mrb[0].mxu0
  %v2171 = vadd.f32 %v1738, %v2170
  %v2172 = vpop.f32.mrb[0].mxu0
  %2173 = vmatprep.mubr.bf16.mxu0 0
  %2174 = vmatmul.mubr.bf16.gmra.mrb[0].mxu0 %v1859
  %v2175 = vpop.f32.mrb[0].mxu0
  %v2176 = vadd.f32 %v1738, %v2175
  %v2177 = vpop.f32.mrb[0].mxu0
  %v2178 = vpop.f32.mrb[0].mxu0
  %v2179 = vadd.f32 %v1738, %v2178
  %v2180 = vpop.f32.mrb[0].mxu0
  %2181 = vdwg.mxu0
  %vm2182 = vcmask 523264
  %2183 = vst.msk [vmem:[%s5] sm:$0xff] %vm2182, %v1896
  %2184 = vst.msk [vmem:[%s5 + $0x8] sm:$0xff] %vm2182, %v1899
  %2185 = vst.msk [vmem:[%s5 + $0x10] sm:$0xff] %vm2182, %v1904
  %2186 = vst.msk [vmem:[%s5 + $0x18] sm:$0xff] %vm2182, %v1907
  %2187 = vst.msk [vmem:[%s5 + $0x20] sm:$0xff] %vm2182, %v1912
  %2188 = vst.msk [vmem:[%s5 + $0x28] sm:$0xff] %vm2182, %v1915
  %2189 = vst.msk [vmem:[%s5 + $0x30] sm:$0xff] %vm2182, %v1920
  %2190 = vst.msk [vmem:[%s5 + $0x38] sm:$0xff] %vm2182, %v1923
  %2191 = vst.msk [vmem:[%s5 + $0x40] sm:$0xff] %vm2182, %v1928
  %2192 = vst.msk [vmem:[%s5 + $0x48] sm:$0xff] %vm2182, %v1931
  %2193 = vst.msk [vmem:[%s5 + $0x50] sm:$0xff] %vm2182, %v1936
  %2194 = vst.msk [vmem:[%s5 + $0x58] sm:$0xff] %vm2182, %v1939
  %2195 = vst.msk [vmem:[%s5 + $0x60] sm:$0xff] %vm2182, %v1944
  %2196 = vst.msk [vmem:[%s5 + $0x68] sm:$0xff] %vm2182, %v1947
  %2197 = vst.msk [vmem:[%s5 + $0x70] sm:$0xff] %vm2182, %v1952
  %2198 = vst.msk [vmem:[%s5 + $0x78] sm:$0xff] %vm2182, %v1955
  %2199 = vst.msk [vmem:[%s5 + $0x80] sm:$0xff] %vm2182, %v1960
  %2200 = vst.msk [vmem:[%s5 + $0x88] sm:$0xff] %vm2182, %v1963
  %2201 = vst.msk [vmem:[%s5 + $0x90] sm:$0xff] %vm2182, %v1968
  %2202 = vst.msk [vmem:[%s5 + $0x98] sm:$0xff] %vm2182, %v1971
  %2203 = vst.msk [vmem:[%s5 + $0xa0] sm:$0xff] %vm2182, %v1976
  %2204 = vst.msk [vmem:[%s5 + $0xa8] sm:$0xff] %vm2182, %v1979
  %2205 = vst.msk [vmem:[%s5 + $0xb0] sm:$0xff] %vm2182, %v1984
  %2206 = vst.msk [vmem:[%s5 + $0xb8] sm:$0xff] %vm2182, %v1987
  %2207 = vst.msk [vmem:[%s5 + $0xc0] sm:$0xff] %vm2182, %v1992
  %2208 = vst.msk [vmem:[%s5 + $0xc8] sm:$0xff] %vm2182, %v1995
  %2209 = vst.msk [vmem:[%s5 + $0xd0] sm:$0xff] %vm2182, %v2000
  %2210 = vst.msk [vmem:[%s5 + $0xd8] sm:$0xff] %vm2182, %v2003
  %2211 = vst.msk [vmem:[%s5 + $0xe0] sm:$0xff] %vm2182, %v2008
  %2212 = vst.msk [vmem:[%s5 + $0xe8] sm:$0xff] %vm2182, %v2011
  %2213 = vst.msk [vmem:[%s5 + $0xf0] sm:$0xff] %vm2182, %v2016
  %2214 = vst.msk [vmem:[%s5 + $0xf8] sm:$0xff] %vm2182, %v2019
  %2215 = vst.msk [vmem:[%s5 + $0x100] sm:$0xff] %vm2182, %v2024
  %2216 = vst.msk [vmem:[%s5 + $0x108] sm:$0xff] %vm2182, %v2027
  %2217 = vst.msk [vmem:[%s5 + $0x110] sm:$0xff] %vm2182, %v2032
  %2218 = vst.msk [vmem:[%s5 + $0x118] sm:$0xff] %vm2182, %v2035
  %2219 = vst.msk [vmem:[%s5 + $0x120] sm:$0xff] %vm2182, %v2040
  %2220 = vst.msk [vmem:[%s5 + $0x128] sm:$0xff] %vm2182, %v2043
  %2221 = vst.msk [vmem:[%s5 + $0x130] sm:$0xff] %vm2182, %v2048
  %2222 = vst.msk [vmem:[%s5 + $0x138] sm:$0xff] %vm2182, %v2051
  %2223 = vst.msk [vmem:[%s5 + $0x140] sm:$0xff] %vm2182, %v2056
  %2224 = vst.msk [vmem:[%s5 + $0x148] sm:$0xff] %vm2182, %v2059
  %2225 = vst.msk [vmem:[%s5 + $0x150] sm:$0xff] %vm2182, %v2064
  %2226 = vst.msk [vmem:[%s5 + $0x158] sm:$0xff] %vm2182, %v2067
  %2227 = vst.msk [vmem:[%s5 + $0x160] sm:$0xff] %vm2182, %v2072
  %2228 = vst.msk [vmem:[%s5 + $0x168] sm:$0xff] %vm2182, %v2075
  %2229 = vst.msk [vmem:[%s5 + $0x170] sm:$0xff] %vm2182, %v2080
  %2230 = vst.msk [vmem:[%s5 + $0x178] sm:$0xff] %vm2182, %v2083
  %2231 = vst.msk [vmem:[%s5 + $0x180] sm:$0xff] %vm2182, %v2088
  %2232 = vst.msk [vmem:[%s5 + $0x188] sm:$0xff] %vm2182, %v2091
  %2233 = vst.msk [vmem:[%s5 + $0x190] sm:$0xff] %vm2182, %v2096
  %2234 = vst.msk [vmem:[%s5 + $0x198] sm:$0xff] %vm2182, %v2099
  %2235 = vst.msk [vmem:[%s5 + $0x1a0] sm:$0xff] %vm2182, %v2104
  %2236 = vst.msk [vmem:[%s5 + $0x1a8] sm:$0xff] %vm2182, %v2107
  %2237 = vst.msk [vmem:[%s5 + $0x1b0] sm:$0xff] %vm2182, %v2112
  %2238 = vst.msk [vmem:[%s5 + $0x1b8] sm:$0xff] %vm2182, %v2115
  %2239 = vst.msk [vmem:[%s5 + $0x1c0] sm:$0xff] %vm2182, %v2120
  %2240 = vst.msk [vmem:[%s5 + $0x1c8] sm:$0xff] %vm2182, %v2123
  %2241 = vst.msk [vmem:[%s5 + $0x1d0] sm:$0xff] %vm2182, %v2128
  %2242 = vst.msk [vmem:[%s5 + $0x1d8] sm:$0xff] %vm2182, %v2131
  %2243 = vst.msk [vmem:[%s5 + $0x1e0] sm:$0xff] %vm2182, %v2136
  %2244 = vst.msk [vmem:[%s5 + $0x1e8] sm:$0xff] %vm2182, %v2139
  %2245 = vst.msk [vmem:[%s5 + $0x1f0] sm:$0xff] %vm2182, %v2144
  %2246 = vst.msk [vmem:[%s5 + $0x1f8] sm:$0xff] %vm2182, %v2147
  %2247 = vst.msk [vmem:[%s5 + $0x200] sm:$0xff] %vm2182, %v2152
  %2248 = vst.msk [vmem:[%s5 + $0x208] sm:$0xff] %vm2182, %v2155
  %2249 = vst.msk [vmem:[%s5 + $0x210] sm:$0xff] %vm2182, %v2160
  %2250 = vst.msk [vmem:[%s5 + $0x218] sm:$0xff] %vm2182, %v2163
  %2251 = vst.msk [vmem:[%s5 + $0x220] sm:$0xff] %vm2182, %v2168
  %2252 = vst.msk [vmem:[%s5 + $0x228] sm:$0xff] %vm2182, %v2171
  %2253 = vst.msk [vmem:[%s5 + $0x230] sm:$0xff] %vm2182, %v2176
  %2254 = vst.msk [vmem:[%s5 + $0x238] sm:$0xff] %vm2182, %v2179
  // Predicated region
  $region22: #{tpu_custom_call.1} parent=0 // pred_check
    _
  $region23: #{tpu_custom_call.1} parent=0 // pred_check_branch
    %2256 = sbr.rel (0) target = $region25
  $region24: #{tpu_custom_call.1} parent=0 // pred_region
    _
  $region25: #{tpu_custom_call.1} parent=0 // pred_fallthru
    _
  // Predicated region
  $region26: #{tpu_custom_call.1} parent=0 // pred_check
    _
  $region27: #{tpu_custom_call.1} parent=0 // pred_check_branch
    %2258 = sbr.rel (0) target = $region29
  $region28: #{tpu_custom_call.1} parent=0 // pred_region
    _
  $region29: #{tpu_custom_call.1} parent=0 // pred_fallthru
    _

</llo_original>
